<compile_context>
chip_gen: v6e
topology: v6e:2x2x1
jax: 0.10.0
libtpu: 0.0.40
codegen_flags: <defaults>
</compile_context>

<pallas_src>
import functools

import jax
import jax.numpy as jnp
from jax.experimental import pallas as pl
from jax.experimental.pallas import tpu as pltpu


# ----------------------------------------------------------------------------
# Positional embedding (host-side glue, computed once per trace)
# ----------------------------------------------------------------------------
def get_1d_pos_emb(size, dim, temperature=10000.0):
    pos = jnp.arange(size, dtype=jnp.float32)
    omega = jnp.arange(dim // 2, dtype=jnp.float32) / (dim / 2 - 1)
    omega = 1.0 / temperature ** omega
    pe = pos[:, None] * omega[None, :]
    return jnp.concatenate([jnp.cos(pe), jnp.sin(pe)], axis=1)       # (size, dim)


def get_2d_pos_emb(patch_num, dim):
    pn0, pn1 = patch_num
    h = get_1d_pos_emb(pn0, dim // 2)
    h = jnp.broadcast_to(h[:, None, :], (pn0, pn1, dim // 2))
    w = get_1d_pos_emb(pn1, dim // 2)
    w = jnp.broadcast_to(w[None, :, :], (pn0, pn1, dim // 2))
    return jnp.concatenate([h, w], axis=-1)                          # (pn0, pn1, dim)


# ----------------------------------------------------------------------------
# Fused ViT kernel
# ----------------------------------------------------------------------------
def _bf16(x):
    return x.astype(jnp.bfloat16)


def _layernorm(x, gamma, beta, eps):
    # One-pass variance: mean(x^2) - mu^2 (saves a full VPU subtract+square
    # pass and an extra XLU reduction per LayerNorm per block).
    mu = jnp.mean(x, axis=-1, keepdims=True)
    var = jnp.mean(x * x, axis=-1, keepdims=True) - mu * mu
    return (x - mu) * jax.lax.rsqrt(var + eps) * gamma + beta


def vit_fused_kernel(
    # inputs -----------------------------------------------------------------
    xp_ref, pos_ref, pe_w_ref, pd_w_ref, pd_b_ref,
    wq_ref, bq_ref, wk_ref, bk_ref, wv_ref, bv_ref,
    proj_w_ref, proj_b_ref,
    g0_ref, bt0_ref, w1_ref, b1_ref, w2_ref, b2_ref, g1_ref, bt1_ref,
    # output / scratch ---------------------------------------------------------
    out_ref,
    act_ref,
    *, tb, tokens, dim, in_dim, dec_pad, eps,
):
    """One grid step == (batch tile b [TB examples], transformer block l).

    Activations for the current batch tile live in `act_ref` (VMEM, f32,
    (TB, P, dim)) and are carried across the block axis; HBM traffic per batch
    tile is the patchified input once (l == 0) and the decoded output once
    (l == last).  Per-block weights are streamed via the block-axis index_map.
    """
    l = pl.program_id(1)
    rows = tb * tokens

    # --- patch embed + positional embedding (first block step only) ----------
    @pl.when(l == 0)
    def _():
        xp = xp_ref[...].reshape(rows, in_dim)                       # bf16
        t = jnp.dot(xp, pe_w_ref[...], preferred_element_type=jnp.float32)
        # pos_ref already has the patch-embed bias folded in (host-side).
        act_ref[...] = t.reshape(tb, tokens, dim) + pos_ref[...]

    x3 = act_ref[...]                                  # (TB, P, dim) float32
    x = x3.reshape(rows, dim)                          # leading-dim merge (free)
    xb = _bf16(x)

    # --- Multi_Head: three lane-aligned projections (scale folded into Wq) ---
    q = (jnp.dot(xb, wq_ref[...], preferred_element_type=jnp.float32)
         + bq_ref[...]).reshape(tb, tokens, dim)
    k = (jnp.dot(xb, wk_ref[...], preferred_element_type=jnp.float32)
         + bk_ref[...]).reshape(tb, tokens, dim)
    v = (jnp.dot(xb, wv_ref[...], preferred_element_type=jnp.float32)
         + bv_ref[...]).reshape(tb, tokens, dim)

    # Per-example attention: q @ k^T via batched contraction of last axes
    # (no transposed copy of k, batch elements never mix).
    scores = jnp.einsum('bqd,bkd->bqk', _bf16(q), _bf16(k),
                        preferred_element_type=jnp.float32)
    scores = scores - jnp.max(scores, axis=-1, keepdims=True)
    p = jnp.exp(scores)
    p = p * pl.reciprocal(jnp.sum(p, axis=-1, keepdims=True), approx=True)
    # attn_drop / proj_drop have p = 0 in the module -> identity.

    attn = jnp.einsum('bqk,bkd->bqd', _bf16(p), _bf16(v),
                      preferred_element_type=jnp.float32)
    attn = attn.reshape(rows, dim)
    attn = (jnp.dot(_bf16(attn), proj_w_ref[...],
                    preferred_element_type=jnp.float32) + proj_b_ref[...])

    # --- residual + LN0 + MLP + residual + LN1 (post-norm, as in the module) --
    x0 = _layernorm(attn + x, g0_ref[...], bt0_ref[...], eps)

    h = (jnp.dot(_bf16(x0), w1_ref[...],
                 preferred_element_type=jnp.float32) + b1_ref[...])
    h = jnp.maximum(h, 0.0)
    y = (jnp.dot(_bf16(h), w2_ref[...],
                 preferred_element_type=jnp.float32) + b2_ref[...])
    y = _layernorm(y + x0, g1_ref[...], bt1_ref[...], eps)

    act_ref[...] = y.reshape(tb, tokens, dim)

    # --- patch decoder (last block step only), lane-dense padded output ------
    @pl.when(l == pl.num_programs(1) - 1)
    def _():
        dec = (jnp.dot(_bf16(y), pd_w_ref[...],
                       preferred_element_type=jnp.float32) + pd_b_ref[...])
        out_ref[...] = dec.reshape(tb, tokens, dec_pad)


# ----------------------------------------------------------------------------
# Parameter construction (deterministic, synthetic) and weight stacking
# ----------------------------------------------------------------------------
def make_params(key, *, in_dim, dim, dec_dim, block_num):
    keys = iter(jax.random.split(key, 2 + 4 * block_num))

    def w(shape):
        return jax.random.normal(next(keys), shape, jnp.float32) * 0.02

    params = {
        "pe_w": w((in_dim, dim)),
        "pe_b": jnp.zeros((dim,), jnp.float32),
        "pd_w": w((dim, dec_dim)),
        "pd_b": jnp.zeros((dec_dim,), jnp.float32),
        "blocks": [],
    }
    for _ in range(block_num):
        params["blocks"].append({
            "qkv_w": w((dim, 3 * dim)), "qkv_b": jnp.zeros((3 * dim,), jnp.float32),
            "proj_w": w((dim, dim)),    "proj_b": jnp.zeros((dim,), jnp.float32),
            "ln0_g": jnp.ones((dim,), jnp.float32),
            "ln0_b": jnp.zeros((dim,), jnp.float32),
            "fc1_w": w((dim, 4 * dim)), "fc1_b": jnp.zeros((4 * dim,), jnp.float32),
            "fc2_w": w((4 * dim, dim)), "fc2_b": jnp.zeros((dim,), jnp.float32),
            "ln1_g": jnp.ones((dim,), jnp.float32),
            "ln1_b": jnp.zeros((dim,), jnp.float32),
        })
    return params


def _stack_block_params(blocks, dim, scale):
    """Stack per-block params on a leading block axis; split the fused QKV
    weights into three lane-aligned (dim, dim) projections; fold the attention
    scale into the q projection; bf16 the matmul weights."""
    def stk(name):
        return jnp.stack([b[name] for b in blocks])

    qkv_w = stk("qkv_w")                       # (L, dim, 3*dim)
    qkv_b = stk("qkv_b")                       # (L, 3*dim)
    # (q * s) @ k^T == (q @ k^T) * s  -> fold s into the q weights + bias.
    wq = qkv_w[:, :, 0 * dim:1 * dim] * scale
    wk = qkv_w[:, :, 1 * dim:2 * dim]
    wv = qkv_w[:, :, 2 * dim:3 * dim]
    bq = qkv_b[:, 0 * dim:1 * dim] * scale
    bk = qkv_b[:, 1 * dim:2 * dim]
    bv = qkv_b[:, 2 * dim:3 * dim]

    return (
        wq.astype(jnp.bfloat16), bq[:, None, :],        # (L,dim,dim), (L,1,dim)
        wk.astype(jnp.bfloat16), bk[:, None, :],
        wv.astype(jnp.bfloat16), bv[:, None, :],
        stk("proj_w").astype(jnp.bfloat16), stk("proj_b")[:, None, :],
        stk("ln0_g")[:, None, :], stk("ln0_b")[:, None, :],
        stk("fc1_w").astype(jnp.bfloat16), stk("fc1_b")[:, None, :],
        stk("fc2_w").astype(jnp.bfloat16), stk("fc2_b")[:, None, :],
        stk("ln1_g")[:, None, :], stk("ln1_b")[:, None, :],
    )


def _default_batch_tile(bs, cap=8):
    """Largest divisor of bs (<= cap) that still leaves >= 2 tiles on the
    parallel grid axis, so both v7x TensorCores get work."""
    best = 1
    for d in range(1, min(bs, cap) + 1):
        if bs % d == 0 and bs // d >= 2:
            best = d
    return best


# ----------------------------------------------------------------------------
# Full forward pass
# ----------------------------------------------------------------------------
def vision_transformer_forward(x, params, *, patch_shape, dim, head_num,
                               batch_tile=None):
    bs, ws, fn, H, W = x.shape
    ps0, ps1 = patch_shape
    pn0, pn1 = H // ps0, W // ps1
    P = pn0 * pn1
    in_dim = ps0 * ps1 * fn * ws
    dec_dim = ps0 * ps1 * ws
    L = len(params["blocks"])
    scale = float((dim // head_num) ** (-0.5))

    TB = batch_tile if batch_tile is not None else _default_batch_tile(bs)
    assert bs % TB == 0, "batch size must be divisible by the batch tile"

    # 'bs ws fn (pn0 ps0) (pn1 ps1) -> bs pn0 pn1 (ps0 ps1 fn ws)'
    xp = x.reshape(bs, ws, fn, pn0, ps0, pn1, ps1)
    xp = xp.transpose(0, 3, 5, 4, 6, 2, 1).reshape(bs, P, in_dim)
    xp = xp.astype(jnp.bfloat16)             # matmul operand: halves input DMA

    # Fold the patch-embed bias into the positional embedding (one less input,
    # one less broadcast-add per batch tile).
    pos = get_2d_pos_emb((pn0, pn1), dim).reshape(P, dim) + params["pe_b"][None, :]

    # Lane-dense decoder output: pad dec_dim up to a multiple of 128 so the
    # final writeback uses unmasked full-lane stores; padding is sliced below.
    dec_pad = -(-dec_dim // 128) * 128
    pd_w = jnp.pad(params["pd_w"], ((0, 0), (0, dec_pad - dec_dim)))
    pd_b = jnp.pad(params["pd_b"], (0, dec_pad - dec_dim))

    stacked = _stack_block_params(params["blocks"], dim, scale)
    pe_w = params["pe_w"].astype(jnp.bfloat16)
    pd_w = pd_w.astype(jnp.bfloat16)
    pd_b = pd_b.reshape(1, dec_pad)

    kernel = functools.partial(vit_fused_kernel, tb=TB, tokens=P, dim=dim,
                               in_dim=in_dim, dec_pad=dec_pad, eps=1e-5)

    batch_map = lambda b, l: (b, 0, 0)
    const_map = lambda b, l: (0, 0)
    block_map = lambda b, l: (l, 0, 0)

    def bspec(arr):        # stacked per-block weight: pipelined over block axis
        return pl.BlockSpec((None,) + arr.shape[1:], block_map)

    in_specs = [
        pl.BlockSpec((TB, P, in_dim), batch_map),     # xp   (per batch tile)
        pl.BlockSpec((P, dim), const_map),            # pos  (+ pe_b folded in)
        pl.BlockSpec((in_dim, dim), const_map),       # pe_w
        pl.BlockSpec((dim, dec_pad), const_map),      # pd_w (lane-padded)
        pl.BlockSpec((1, dec_pad), const_map),        # pd_b
    ] + [bspec(a) for a in stacked]

    # TODO(synk): at production sizes, stage xp/pe_w/pd_w/pd_b/pos via
    # memory_space=pl.ANY + manual DMA inside the l==0 / l==last branches so
    # they don't stay VMEM-resident (and double-buffered) for every block step,
    # and tile the 4*dim MLP hidden dim — both matter on v7x's 64 MiB VMEM.
    dec = pl.pallas_call(
        kernel,
        grid=(bs // TB, L),
        out_shape=jax.ShapeDtypeStruct((bs, P, dec_pad), jnp.float32),
        in_specs=in_specs,
        out_specs=pl.BlockSpec((TB, P, dec_pad), batch_map),
        scratch_shapes=[pltpu.VMEM((TB, P, dim), jnp.float32)],
        compiler_params=pltpu.CompilerParams(
            dimension_semantics=("parallel", "arbitrary"),
            vmem_limit_bytes=48 * 1024 * 1024),
    )(xp, pos, pe_w, pd_w, pd_b, *stacked)

    # 'bs (pn0 pn1) (ps0 ps1 ws) -> bs ws 1 (pn0 ps0) (pn1 ps1)'
    y = dec[..., :dec_dim].reshape(bs, pn0, pn1, ps0, ps1, ws)
    y = y.transpose(0, 5, 1, 3, 2, 4)
    return y.reshape(bs, ws, 1, pn0 * ps0, pn1 * ps1)


# ----------------------------------------------------------------------------
if __name__ == "__main__":
    image_shape = (16, 16)
    patch_shape = (4, 4)
    input_steps = 2
    num_features = 4
    dim = 32
    head_num = 4
    block_num = 2
    batch = 4          # -> 2 batch tiles of TB=2: both v7x TCs fed, MXU rows x2

    in_dim = patch_shape[0] * patch_shape[1] * num_features * input_steps   # 128
    dec_dim = patch_shape[0] * patch_shape[1] * input_steps                 # 32

    key = jax.random.PRNGKey(0)
    k_x, k_p = jax.random.split(key)
    x = jax.random.normal(
        k_x, (batch, input_steps, num_features, image_shape[0], image_shape[1]),
        jnp.float32,
    )
    params = make_params(k_p, in_dim=in_dim, dim=dim, dec_dim=dec_dim,
                         block_num=block_num)

    fwd = jax.jit(functools.partial(
        vision_transformer_forward,
        patch_shape=patch_shape, dim=dim, head_num=head_num))

    out = fwd(x, params)
    jax.block_until_ready(out)
    assert out.shape == (batch, input_steps, 1, image_shape[0], image_shape[1])
    assert bool(jnp.all(jnp.isfinite(out)))
    print("KERNEL_OK")
</pallas_src>

<mosaic_0001>
module attributes {stable_mosaic.version = 11 : i64} {
  func.func @vit_fused_kernel(%arg0: i32, %arg1: i32, %arg2: memref<2x16x128xbf16, #tpu.memory_space<vmem>>, %arg3: memref<16x32xf32, #tpu.memory_space<vmem>>, %arg4: memref<128x32xbf16, #tpu.memory_space<vmem>>, %arg5: memref<32x128xbf16, #tpu.memory_space<vmem>>, %arg6: memref<1x128xf32, #tpu.memory_space<vmem>>, %arg7: memref<1x32x32xbf16, #tpu.memory_space<vmem>>, %arg8: memref<1x1x32xf32, #tpu.memory_space<vmem>>, %arg9: memref<1x32x32xbf16, #tpu.memory_space<vmem>>, %arg10: memref<1x1x32xf32, #tpu.memory_space<vmem>>, %arg11: memref<1x32x32xbf16, #tpu.memory_space<vmem>>, %arg12: memref<1x1x32xf32, #tpu.memory_space<vmem>>, %arg13: memref<1x32x32xbf16, #tpu.memory_space<vmem>>, %arg14: memref<1x1x32xf32, #tpu.memory_space<vmem>>, %arg15: memref<1x1x32xf32, #tpu.memory_space<vmem>>, %arg16: memref<1x1x32xf32, #tpu.memory_space<vmem>>, %arg17: memref<1x32x128xbf16, #tpu.memory_space<vmem>>, %arg18: memref<1x1x128xf32, #tpu.memory_space<vmem>>, %arg19: memref<1x128x32xbf16, #tpu.memory_space<vmem>>, %arg20: memref<1x1x32xf32, #tpu.memory_space<vmem>>, %arg21: memref<1x1x32xf32, #tpu.memory_space<vmem>>, %arg22: memref<1x1x32xf32, #tpu.memory_space<vmem>>, %arg23: memref<2x16x128xf32, #tpu.memory_space<vmem>>, %arg24: memref<2x16x32xf32, #tpu.memory_space<vmem>>) attributes {dimension_semantics = [#tpu.dimension_semantics<parallel>, #tpu.dimension_semantics<arbitrary>], iteration_bounds = array<i64: 2, 2>, scalar_prefetch = 0 : i64, scratch_operands = 1 : i64, tpu.core_type = #tpu.core_type<tc>, window_params = [{transform_indices = @transform_0, window_bounds = array<i64: 2, 16, 128>}, {pipeline_mode = #tpu.pipeline_mode<synchronous>, transform_indices = @transform_1, window_bounds = array<i64: 16, 32>}, {pipeline_mode = #tpu.pipeline_mode<synchronous>, transform_indices = @transform_2, window_bounds = array<i64: 128, 32>}, {pipeline_mode = #tpu.pipeline_mode<synchronous>, transform_indices = @transform_3, window_bounds = array<i64: 32, 128>}, {pipeline_mode = #tpu.pipeline_mode<synchronous>, transform_indices = @transform_4, window_bounds = array<i64: 1, 128>}, {transform_indices = @transform_5, window_bounds = array<i64: 1, 32, 32>}, {transform_indices = @transform_6, window_bounds = array<i64: 1, 1, 32>}, {transform_indices = @transform_7, window_bounds = array<i64: 1, 32, 32>}, {transform_indices = @transform_8, window_bounds = array<i64: 1, 1, 32>}, {transform_indices = @transform_9, window_bounds = array<i64: 1, 32, 32>}, {transform_indices = @transform_10, window_bounds = array<i64: 1, 1, 32>}, {transform_indices = @transform_11, window_bounds = array<i64: 1, 32, 32>}, {transform_indices = @transform_12, window_bounds = array<i64: 1, 1, 32>}, {transform_indices = @transform_13, window_bounds = array<i64: 1, 1, 32>}, {transform_indices = @transform_14, window_bounds = array<i64: 1, 1, 32>}, {transform_indices = @transform_15, window_bounds = array<i64: 1, 32, 128>}, {transform_indices = @transform_16, window_bounds = array<i64: 1, 1, 128>}, {transform_indices = @transform_17, window_bounds = array<i64: 1, 128, 32>}, {transform_indices = @transform_18, window_bounds = array<i64: 1, 1, 32>}, {transform_indices = @transform_19, window_bounds = array<i64: 1, 1, 32>}, {transform_indices = @transform_20, window_bounds = array<i64: 1, 1, 32>}, {transform_indices = @transform_21, window_bounds = array<i64: 2, 16, 128>}]} {
    %c0_i32 = arith.constant 0 : i32
    %0 = arith.cmpi eq, %arg1, %c0_i32 : i32
    %1 = arith.extui %0 : i1 to i32
    %c0_i32_0 = arith.constant 0 : i32
    %2 = arith.cmpi ne, %1, %c0_i32_0 : i32
    scf.if %2 {
      %c0_75 = arith.constant 0 : index
      %c0_76 = arith.constant 0 : index
      %c0_77 = arith.constant 0 : index
      %132 = vector.load %arg2[%c0_75, %c0_76, %c0_77] : memref<2x16x128xbf16, #tpu.memory_space<vmem>>, vector<2x16x128xbf16>
      %133 = vector.shape_cast %132 : vector<2x16x128xbf16> to vector<32x128xbf16>
      %c0_78 = arith.constant 0 : index
      %c0_79 = arith.constant 0 : index
      %134 = vector.load %arg4[%c0_78, %c0_79] : memref<128x32xbf16, #tpu.memory_space<vmem>>, vector<128x32xbf16>
      %cst_80 = arith.constant dense<0.000000e+00> : vector<32x32xf32>
      %135 = tpu.matmul %133, %134, %cst_80 {dimension_numbers = #tpu.dot_dimension_numbers<[1], [0], [0], [1], [0, 0, 1, 1], [], []>} : vector<32x128xbf16>, vector<128x32xbf16>, vector<32x32xf32> -> vector<32x32xf32>
      %136 = vector.shape_cast %135 : vector<32x32xf32> to vector<2x16x32xf32>
      %c0_81 = arith.constant 0 : index
      %c0_82 = arith.constant 0 : index
      %137 = vector.load %arg3[%c0_81, %c0_82] : memref<16x32xf32, #tpu.memory_space<vmem>>, vector<16x32xf32>
      %138 = vector.shape_cast %137 : vector<16x32xf32> to vector<1x16x32xf32>
      %139 = vector.broadcast %138 : vector<1x16x32xf32> to vector<2x16x32xf32>
      %140 = arith.addf %136, %139 : vector<2x16x32xf32>
      %c0_83 = arith.constant 0 : index
      %c0_84 = arith.constant 0 : index
      %c0_85 = arith.constant 0 : index
      %141 = vector.load %arg24[%c0_83, %c0_84, %c0_85] : memref<2x16x32xf32, #tpu.memory_space<vmem>>, vector<2x16x32xf32>
      tpu.vector_store %arg24[%c0_83, %c0_84, %c0_85], %140 {strides = array<i32>} : memref<2x16x32xf32, #tpu.memory_space<vmem>>, vector<2x16x32xf32>,
    } else {
    }
    %c0 = arith.constant 0 : index
    %c0_1 = arith.constant 0 : index
    %c0_2 = arith.constant 0 : index
    %3 = vector.load %arg24[%c0, %c0_1, %c0_2] : memref<2x16x32xf32, #tpu.memory_space<vmem>>, vector<2x16x32xf32>
    %4 = vector.shape_cast %3 : vector<2x16x32xf32> to vector<32x32xf32>
    %5 = arith.truncf %4 : vector<32x32xf32> to vector<32x32xbf16>
    %c0_3 = arith.constant 0 : index
    %c0_4 = arith.constant 0 : index
    %c0_5 = arith.constant 0 : index
    %6 = vector.load %arg7[%c0_3, %c0_4, %c0_5] : memref<1x32x32xbf16, #tpu.memory_space<vmem>>, vector<1x32x32xbf16>
    %7 = vector.shape_cast %6 : vector<1x32x32xbf16> to vector<32x32xbf16>
    %cst = arith.constant dense<0.000000e+00> : vector<32x32xf32>
    %8 = tpu.matmul %5, %7, %cst {dimension_numbers = #tpu.dot_dimension_numbers<[1], [0], [0], [1], [0, 0, 1, 1], [], []>} : vector<32x32xbf16>, vector<32x32xbf16>, vector<32x32xf32> -> vector<32x32xf32>
    %c0_6 = arith.constant 0 : index
    %c0_7 = arith.constant 0 : index
    %c0_8 = arith.constant 0 : index
    %9 = vector.load %arg8[%c0_6, %c0_7, %c0_8] : memref<1x1x32xf32, #tpu.memory_space<vmem>>, vector<1x1x32xf32>
    %10 = vector.shape_cast %9 : vector<1x1x32xf32> to vector<1x32xf32>
    %11 = vector.broadcast %10 : vector<1x32xf32> to vector<32x32xf32>
    %12 = arith.addf %8, %11 : vector<32x32xf32>
    %13 = vector.shape_cast %12 : vector<32x32xf32> to vector<2x16x32xf32>
    %c0_9 = arith.constant 0 : index
    %c0_10 = arith.constant 0 : index
    %c0_11 = arith.constant 0 : index
    %14 = vector.load %arg9[%c0_9, %c0_10, %c0_11] : memref<1x32x32xbf16, #tpu.memory_space<vmem>>, vector<1x32x32xbf16>
    %15 = vector.shape_cast %14 : vector<1x32x32xbf16> to vector<32x32xbf16>
    %cst_12 = arith.constant dense<0.000000e+00> : vector<32x32xf32>
    %16 = tpu.matmul %5, %15, %cst_12 {dimension_numbers = #tpu.dot_dimension_numbers<[1], [0], [0], [1], [0, 0, 1, 1], [], []>} : vector<32x32xbf16>, vector<32x32xbf16>, vector<32x32xf32> -> vector<32x32xf32>
    %c0_13 = arith.constant 0 : index
    %c0_14 = arith.constant 0 : index
    %c0_15 = arith.constant 0 : index
    %17 = vector.load %arg10[%c0_13, %c0_14, %c0_15] : memref<1x1x32xf32, #tpu.memory_space<vmem>>, vector<1x1x32xf32>
    %18 = vector.shape_cast %17 : vector<1x1x32xf32> to vector<1x32xf32>
    %19 = vector.broadcast %18 : vector<1x32xf32> to vector<32x32xf32>
    %20 = arith.addf %16, %19 : vector<32x32xf32>
    %21 = vector.shape_cast %20 : vector<32x32xf32> to vector<2x16x32xf32>
    %c0_16 = arith.constant 0 : index
    %c0_17 = arith.constant 0 : index
    %c0_18 = arith.constant 0 : index
    %22 = vector.load %arg11[%c0_16, %c0_17, %c0_18] : memref<1x32x32xbf16, #tpu.memory_space<vmem>>, vector<1x32x32xbf16>
    %23 = vector.shape_cast %22 : vector<1x32x32xbf16> to vector<32x32xbf16>
    %cst_19 = arith.constant dense<0.000000e+00> : vector<32x32xf32>
    %24 = tpu.matmul %5, %23, %cst_19 {dimension_numbers = #tpu.dot_dimension_numbers<[1], [0], [0], [1], [0, 0, 1, 1], [], []>} : vector<32x32xbf16>, vector<32x32xbf16>, vector<32x32xf32> -> vector<32x32xf32>
    %c0_20 = arith.constant 0 : index
    %c0_21 = arith.constant 0 : index
    %c0_22 = arith.constant 0 : index
    %25 = vector.load %arg12[%c0_20, %c0_21, %c0_22] : memref<1x1x32xf32, #tpu.memory_space<vmem>>, vector<1x1x32xf32>
    %26 = vector.shape_cast %25 : vector<1x1x32xf32> to vector<1x32xf32>
    %27 = vector.broadcast %26 : vector<1x32xf32> to vector<32x32xf32>
    %28 = arith.addf %24, %27 : vector<32x32xf32>
    %29 = vector.shape_cast %28 : vector<32x32xf32> to vector<2x16x32xf32>
    %30 = arith.truncf %13 : vector<2x16x32xf32> to vector<2x16x32xbf16>
    %31 = arith.truncf %21 : vector<2x16x32xf32> to vector<2x16x32xbf16>
    "tpu.trace_start"() <{level = 10 : i32, message = "bqd,bkd->bqk"}> : () -> ()
    %cst_23 = arith.constant dense<0.000000e+00> : vector<2x16x16xf32>
    %32 = tpu.matmul %30, %31, %cst_23 {dimension_numbers = #tpu.dot_dimension_numbers<[2], [2], [1], [1], [0, 0, 0, 1, 1, 1], [0], [0]>} : vector<2x16x32xbf16>, vector<2x16x32xbf16>, vector<2x16x16xf32> -> vector<2x16x16xf32>
    "tpu.trace_stop"() : () -> ()
    %cst_24 = arith.constant dense<0xFF800000> : vector<2x16xf32>
    %33 = vector.multi_reduction <maximumf>, %32, %cst_24 [2] : vector<2x16x16xf32> to vector<2x16xf32>
    %34 = vector.shape_cast %33 : vector<2x16xf32> to vector<2x16x1xf32>
    %35 = vector.broadcast %34 : vector<2x16x1xf32> to vector<2x16x16xf32>
    %36 = arith.subf %32, %35 : vector<2x16x16xf32>
    %37 = math.exp %36 : vector<2x16x16xf32>
    %cst_25 = arith.constant dense<0.000000e+00> : vector<2x16xf32>
    %38 = vector.multi_reduction <add>, %37, %cst_25 [2] : vector<2x16x16xf32> to vector<2x16xf32>
    %39 = vector.shape_cast %38 : vector<2x16xf32> to vector<2x16x1xf32>
    %40 = tpu.reciprocal %39 {approx = true} : vector<2x16x1xf32> -> vector<2x16x1xf32>
    %41 = vector.broadcast %40 : vector<2x16x1xf32> to vector<2x16x16xf32>
    %42 = arith.mulf %37, %41 : vector<2x16x16xf32>
    %43 = arith.truncf %42 : vector<2x16x16xf32> to vector<2x16x16xbf16>
    %44 = arith.truncf %29 : vector<2x16x32xf32> to vector<2x16x32xbf16>
    "tpu.trace_start"() <{level = 10 : i32, message = "bqk,bkd->bqd"}> : () -> ()
    %cst_26 = arith.constant dense<0.000000e+00> : vector<2x16x32xf32>
    %45 = tpu.matmul %43, %44, %cst_26 {dimension_numbers = #tpu.dot_dimension_numbers<[2], [1], [1], [2], [0, 0, 0, 1, 1, 2], [0], [0]>} : vector<2x16x16xbf16>, vector<2x16x32xbf16>, vector<2x16x32xf32> -> vector<2x16x32xf32>
    "tpu.trace_stop"() : () -> ()
    %46 = vector.shape_cast %45 : vector<2x16x32xf32> to vector<32x32xf32>
    %47 = arith.truncf %46 : vector<32x32xf32> to vector<32x32xbf16>
    %c0_27 = arith.constant 0 : index
    %c0_28 = arith.constant 0 : index
    %c0_29 = arith.constant 0 : index
    %48 = vector.load %arg13[%c0_27, %c0_28, %c0_29] : memref<1x32x32xbf16, #tpu.memory_space<vmem>>, vector<1x32x32xbf16>
    %49 = vector.shape_cast %48 : vector<1x32x32xbf16> to vector<32x32xbf16>
    %cst_30 = arith.constant dense<0.000000e+00> : vector<32x32xf32>
    %50 = tpu.matmul %47, %49, %cst_30 {dimension_numbers = #tpu.dot_dimension_numbers<[1], [0], [0], [1], [0, 0, 1, 1], [], []>} : vector<32x32xbf16>, vector<32x32xbf16>, vector<32x32xf32> -> vector<32x32xf32>
    %c0_31 = arith.constant 0 : index
    %c0_32 = arith.constant 0 : index
    %c0_33 = arith.constant 0 : index
    %51 = vector.load %arg14[%c0_31, %c0_32, %c0_33] : memref<1x1x32xf32, #tpu.memory_space<vmem>>, vector<1x1x32xf32>
    %52 = vector.shape_cast %51 : vector<1x1x32xf32> to vector<1x32xf32>
    %53 = vector.broadcast %52 : vector<1x32xf32> to vector<32x32xf32>
    %54 = arith.addf %50, %53 : vector<32x32xf32>
    %55 = arith.addf %54, %4 : vector<32x32xf32>
    %c0_34 = arith.constant 0 : index
    %c0_35 = arith.constant 0 : index
    %c0_36 = arith.constant 0 : index
    %56 = vector.load %arg15[%c0_34, %c0_35, %c0_36] : memref<1x1x32xf32, #tpu.memory_space<vmem>>, vector<1x1x32xf32>
    %57 = vector.shape_cast %56 : vector<1x1x32xf32> to vector<1x32xf32>
    %c0_37 = arith.constant 0 : index
    %c0_38 = arith.constant 0 : index
    %c0_39 = arith.constant 0 : index
    %58 = vector.load %arg16[%c0_37, %c0_38, %c0_39] : memref<1x1x32xf32, #tpu.memory_space<vmem>>, vector<1x1x32xf32>
    %59 = vector.shape_cast %58 : vector<1x1x32xf32> to vector<1x32xf32>
    %cst_40 = arith.constant dense<0.000000e+00> : vector<32xf32>
    %60 = vector.multi_reduction <add>, %55, %cst_40 [1] : vector<32x32xf32> to vector<32xf32>
    %61 = vector.shape_cast %60 : vector<32xf32> to vector<32x1xf32>
    %cst_41 = arith.constant 3.200000e+01 : f32
    %62 = vector.broadcast %cst_41 : f32 to vector<32x1xf32>
    %63 = arith.divf %61, %62 : vector<32x1xf32>
    %64 = arith.mulf %55, %55 : vector<32x32xf32>
    %cst_42 = arith.constant dense<0.000000e+00> : vector<32xf32>
    %65 = vector.multi_reduction <add>, %64, %cst_42 [1] : vector<32x32xf32> to vector<32xf32>
    %66 = vector.shape_cast %65 : vector<32xf32> to vector<32x1xf32>
    %cst_43 = arith.constant 3.200000e+01 : f32
    %67 = vector.broadcast %cst_43 : f32 to vector<32x1xf32>
    %68 = arith.divf %66, %67 : vector<32x1xf32>
    %69 = arith.mulf %63, %63 : vector<32x1xf32>
    %70 = arith.subf %68, %69 : vector<32x1xf32>
    %71 = vector.broadcast %63 : vector<32x1xf32> to vector<32x32xf32>
    %72 = arith.subf %55, %71 : vector<32x32xf32>
    %cst_44 = arith.constant 9.99999974E-6 : f32
    %73 = vector.broadcast %cst_44 : f32 to vector<32x1xf32>
    %74 = arith.addf %70, %73 : vector<32x1xf32>
    %75 = math.rsqrt %74 : vector<32x1xf32>
    %76 = vector.broadcast %75 : vector<32x1xf32> to vector<32x32xf32>
    %77 = arith.mulf %72, %76 : vector<32x32xf32>
    %78 = vector.broadcast %57 : vector<1x32xf32> to vector<32x32xf32>
    %79 = arith.mulf %77, %78 : vector<32x32xf32>
    %80 = vector.broadcast %59 : vector<1x32xf32> to vector<32x32xf32>
    %81 = arith.addf %79, %80 : vector<32x32xf32>
    %82 = arith.truncf %81 : vector<32x32xf32> to vector<32x32xbf16>
    %c0_45 = arith.constant 0 : index
    %c0_46 = arith.constant 0 : index
    %c0_47 = arith.constant 0 : index
    %83 = vector.load %arg17[%c0_45, %c0_46, %c0_47] : memref<1x32x128xbf16, #tpu.memory_space<vmem>>, vector<1x32x128xbf16>
    %84 = vector.shape_cast %83 : vector<1x32x128xbf16> to vector<32x128xbf16>
    %cst_48 = arith.constant dense<0.000000e+00> : vector<32x128xf32>
    %85 = tpu.matmul %82, %84, %cst_48 {dimension_numbers = #tpu.dot_dimension_numbers<[1], [0], [0], [1], [0, 0, 1, 1], [], []>} : vector<32x32xbf16>, vector<32x128xbf16>, vector<32x128xf32> -> vector<32x128xf32>
    %c0_49 = arith.constant 0 : index
    %c0_50 = arith.constant 0 : index
    %c0_51 = arith.constant 0 : index
    %86 = vector.load %arg18[%c0_49, %c0_50, %c0_51] : memref<1x1x128xf32, #tpu.memory_space<vmem>>, vector<1x1x128xf32>
    %87 = vector.shape_cast %86 : vector<1x1x128xf32> to vector<1x128xf32>
    %88 = vector.broadcast %87 : vector<1x128xf32> to vector<32x128xf32>
    %89 = arith.addf %85, %88 : vector<32x128xf32>
    %cst_52 = arith.constant 0.000000e+00 : f32
    %90 = vector.broadcast %cst_52 : f32 to vector<32x128xf32>
    %91 = arith.maximumf %89, %90 : vector<32x128xf32>
    %92 = arith.truncf %91 : vector<32x128xf32> to vector<32x128xbf16>
    %c0_53 = arith.constant 0 : index
    %c0_54 = arith.constant 0 : index
    %c0_55 = arith.constant 0 : index
    %93 = vector.load %arg19[%c0_53, %c0_54, %c0_55] : memref<1x128x32xbf16, #tpu.memory_space<vmem>>, vector<1x128x32xbf16>
    %94 = vector.shape_cast %93 : vector<1x128x32xbf16> to vector<128x32xbf16>
    %cst_56 = arith.constant dense<0.000000e+00> : vector<32x32xf32>
    %95 = tpu.matmul %92, %94, %cst_56 {dimension_numbers = #tpu.dot_dimension_numbers<[1], [0], [0], [1], [0, 0, 1, 1], [], []>} : vector<32x128xbf16>, vector<128x32xbf16>, vector<32x32xf32> -> vector<32x32xf32>
    %c0_57 = arith.constant 0 : index
    %c0_58 = arith.constant 0 : index
    %c0_59 = arith.constant 0 : index
    %96 = vector.load %arg20[%c0_57, %c0_58, %c0_59] : memref<1x1x32xf32, #tpu.memory_space<vmem>>, vector<1x1x32xf32>
    %97 = vector.shape_cast %96 : vector<1x1x32xf32> to vector<1x32xf32>
    %98 = vector.broadcast %97 : vector<1x32xf32> to vector<32x32xf32>
    %99 = arith.addf %95, %98 : vector<32x32xf32>
    %100 = arith.addf %99, %81 : vector<32x32xf32>
    %c0_60 = arith.constant 0 : index
    %c0_61 = arith.constant 0 : index
    %c0_62 = arith.constant 0 : index
    %101 = vector.load %arg21[%c0_60, %c0_61, %c0_62] : memref<1x1x32xf32, #tpu.memory_space<vmem>>, vector<1x1x32xf32>
    %102 = vector.shape_cast %101 : vector<1x1x32xf32> to vector<1x32xf32>
    %c0_63 = arith.constant 0 : index
    %c0_64 = arith.constant 0 : index
    %c0_65 = arith.constant 0 : index
    %103 = vector.load %arg22[%c0_63, %c0_64, %c0_65] : memref<1x1x32xf32, #tpu.memory_space<vmem>>, vector<1x1x32xf32>
    %104 = vector.shape_cast %103 : vector<1x1x32xf32> to vector<1x32xf32>
    %cst_66 = arith.constant dense<0.000000e+00> : vector<32xf32>
    %105 = vector.multi_reduction <add>, %100, %cst_66 [1] : vector<32x32xf32> to vector<32xf32>
    %106 = vector.shape_cast %105 : vector<32xf32> to vector<32x1xf32>
    %cst_67 = arith.constant 3.200000e+01 : f32
    %107 = vector.broadcast %cst_67 : f32 to vector<32x1xf32>
    %108 = arith.divf %106, %107 : vector<32x1xf32>
    %109 = arith.mulf %100, %100 : vector<32x32xf32>
    %cst_68 = arith.constant dense<0.000000e+00> : vector<32xf32>
    %110 = vector.multi_reduction <add>, %109, %cst_68 [1] : vector<32x32xf32> to vector<32xf32>
    %111 = vector.shape_cast %110 : vector<32xf32> to vector<32x1xf32>
    %cst_69 = arith.constant 3.200000e+01 : f32
    %112 = vector.broadcast %cst_69 : f32 to vector<32x1xf32>
    %113 = arith.divf %111, %112 : vector<32x1xf32>
    %114 = arith.mulf %108, %108 : vector<32x1xf32>
    %115 = arith.subf %113, %114 : vector<32x1xf32>
    %116 = vector.broadcast %108 : vector<32x1xf32> to vector<32x32xf32>
    %117 = arith.subf %100, %116 : vector<32x32xf32>
    %cst_70 = arith.constant 9.99999974E-6 : f32
    %118 = vector.broadcast %cst_70 : f32 to vector<32x1xf32>
    %119 = arith.addf %115, %118 : vector<32x1xf32>
    %120 = math.rsqrt %119 : vector<32x1xf32>
    %121 = vector.broadcast %120 : vector<32x1xf32> to vector<32x32xf32>
    %122 = arith.mulf %117, %121 : vector<32x32xf32>
    %123 = vector.broadcast %102 : vector<1x32xf32> to vector<32x32xf32>
    %124 = arith.mulf %122, %123 : vector<32x32xf32>
    %125 = vector.broadcast %104 : vector<1x32xf32> to vector<32x32xf32>
    %126 = arith.addf %124, %125 : vector<32x32xf32>
    %127 = vector.shape_cast %126 : vector<32x32xf32> to vector<2x16x32xf32>
    %c0_71 = arith.constant 0 : index
    %c0_72 = arith.constant 0 : index
    %c0_73 = arith.constant 0 : index
    %128 = vector.load %arg24[%c0_71, %c0_72, %c0_73] : memref<2x16x32xf32, #tpu.memory_space<vmem>>, vector<2x16x32xf32>
    tpu.vector_store %arg24[%c0_71, %c0_72, %c0_73], %127 {strides = array<i32>} : memref<2x16x32xf32, #tpu.memory_space<vmem>>, vector<2x16x32xf32>,
    %c1_i32 = arith.constant 1 : i32
    %129 = arith.cmpi eq, %arg1, %c1_i32 : i32
    %130 = arith.extui %129 : i1 to i32
    %c0_i32_74 = arith.constant 0 : i32
    %131 = arith.cmpi ne, %130, %c0_i32_74 : i32
    scf.if %131 {
      %132 = arith.truncf %126 : vector<32x32xf32> to vector<32x32xbf16>
      %c0_75 = arith.constant 0 : index
      %c0_76 = arith.constant 0 : index
      %133 = vector.load %arg5[%c0_75, %c0_76] : memref<32x128xbf16, #tpu.memory_space<vmem>>, vector<32x128xbf16>
      %cst_77 = arith.constant dense<0.000000e+00> : vector<32x128xf32>
      %134 = tpu.matmul %132, %133, %cst_77 {dimension_numbers = #tpu.dot_dimension_numbers<[1], [0], [0], [1], [0, 0, 1, 1], [], []>} : vector<32x32xbf16>, vector<32x128xbf16>, vector<32x128xf32> -> vector<32x128xf32>
      %c0_78 = arith.constant 0 : index
      %c0_79 = arith.constant 0 : index
      %135 = vector.load %arg6[%c0_78, %c0_79] : memref<1x128xf32, #tpu.memory_space<vmem>>, vector<1x128xf32>
      %136 = vector.broadcast %135 : vector<1x128xf32> to vector<32x128xf32>
      %137 = arith.addf %134, %136 : vector<32x128xf32>
      %138 = vector.shape_cast %137 : vector<32x128xf32> to vector<2x16x128xf32>
      %c0_80 = arith.constant 0 : index
      %c0_81 = arith.constant 0 : index
      %c0_82 = arith.constant 0 : index
      %139 = vector.load %arg23[%c0_80, %c0_81, %c0_82] : memref<2x16x128xf32, #tpu.memory_space<vmem>>, vector<2x16x128xf32>
      tpu.vector_store %arg23[%c0_80, %c0_81, %c0_82], %138 {strides = array<i32>} : memref<2x16x128xf32, #tpu.memory_space<vmem>>, vector<2x16x128xf32>,
    } else {
    }
    return
  }
  func.func @transform_0(%arg0: i32, %arg1: i32) -> (i32, i32, i32) {
    %c0_i32 = arith.constant 0 : i32
    %c0_i32_0 = arith.constant 0 : i32
    %c0_i32_1 = arith.constant 0 : i32
    return %arg0, %c0_i32, %c0_i32_0 : i32, i32, i32
  }
  func.func @transform_1(%arg0: i32, %arg1: i32) -> (i32, i32) {
    %c0_i32 = arith.constant 0 : i32
    %c0_i32_0 = arith.constant 0 : i32
    %c0_i32_1 = arith.constant 0 : i32
    return %c0_i32, %c0_i32_0 : i32, i32
  }
  func.func @transform_2(%arg0: i32, %arg1: i32) -> (i32, i32) {
    %c0_i32 = arith.constant 0 : i32
    %c0_i32_0 = arith.constant 0 : i32
    %c0_i32_1 = arith.constant 0 : i32
    return %c0_i32, %c0_i32_0 : i32, i32
  }
  func.func @transform_3(%arg0: i32, %arg1: i32) -> (i32, i32) {
    %c0_i32 = arith.constant 0 : i32
    %c0_i32_0 = arith.constant 0 : i32
    %c0_i32_1 = arith.constant 0 : i32
    return %c0_i32, %c0_i32_0 : i32, i32
  }
  func.func @transform_4(%arg0: i32, %arg1: i32) -> (i32, i32) {
    %c0_i32 = arith.constant 0 : i32
    %c0_i32_0 = arith.constant 0 : i32
    %c0_i32_1 = arith.constant 0 : i32
    return %c0_i32, %c0_i32_0 : i32, i32
  }
  func.func @transform_5(%arg0: i32, %arg1: i32) -> (i32, i32, i32) {
    %c0_i32 = arith.constant 0 : i32
    %c0_i32_0 = arith.constant 0 : i32
    %c0_i32_1 = arith.constant 0 : i32
    return %arg1, %c0_i32, %c0_i32_0 : i32, i32, i32
  }
  func.func @transform_6(%arg0: i32, %arg1: i32) -> (i32, i32, i32) {
    %c0_i32 = arith.constant 0 : i32
    %c0_i32_0 = arith.constant 0 : i32
    %c0_i32_1 = arith.constant 0 : i32
    return %arg1, %c0_i32, %c0_i32_0 : i32, i32, i32
  }
  func.func @transform_7(%arg0: i32, %arg1: i32) -> (i32, i32, i32) {
    %c0_i32 = arith.constant 0 : i32
    %c0_i32_0 = arith.constant 0 : i32
    %c0_i32_1 = arith.constant 0 : i32
    return %arg1, %c0_i32, %c0_i32_0 : i32, i32, i32
  }
  func.func @transform_8(%arg0: i32, %arg1: i32) -> (i32, i32, i32) {
    %c0_i32 = arith.constant 0 : i32
    %c0_i32_0 = arith.constant 0 : i32
    %c0_i32_1 = arith.constant 0 : i32
    return %arg1, %c0_i32, %c0_i32_0 : i32, i32, i32
  }
  func.func @transform_9(%arg0: i32, %arg1: i32) -> (i32, i32, i32) {
    %c0_i32 = arith.constant 0 : i32
    %c0_i32_0 = arith.constant 0 : i32
    %c0_i32_1 = arith.constant 0 : i32
    return %arg1, %c0_i32, %c0_i32_0 : i32, i32, i32
  }
  func.func @transform_10(%arg0: i32, %arg1: i32) -> (i32, i32, i32) {
    %c0_i32 = arith.constant 0 : i32
    %c0_i32_0 = arith.constant 0 : i32
    %c0_i32_1 = arith.constant 0 : i32
    return %arg1, %c0_i32, %c0_i32_0 : i32, i32, i32
  }
  func.func @transform_11(%arg0: i32, %arg1: i32) -> (i32, i32, i32) {
    %c0_i32 = arith.constant 0 : i32
    %c0_i32_0 = arith.constant 0 : i32
    %c0_i32_1 = arith.constant 0 : i32
    return %arg1, %c0_i32, %c0_i32_0 : i32, i32, i32
  }
  func.func @transform_12(%arg0: i32, %arg1: i32) -> (i32, i32, i32) {
    %c0_i32 = arith.constant 0 : i32
    %c0_i32_0 = arith.constant 0 : i32
    %c0_i32_1 = arith.constant 0 : i32
    return %arg1, %c0_i32, %c0_i32_0 : i32, i32, i32
  }
  func.func @transform_13(%arg0: i32, %arg1: i32) -> (i32, i32, i32) {
    %c0_i32 = arith.constant 0 : i32
    %c0_i32_0 = arith.constant 0 : i32
    %c0_i32_1 = arith.constant 0 : i32
    return %arg1, %c0_i32, %c0_i32_0 : i32, i32, i32
  }
  func.func @transform_14(%arg0: i32, %arg1: i32) -> (i32, i32, i32) {
    %c0_i32 = arith.constant 0 : i32
    %c0_i32_0 = arith.constant 0 : i32
    %c0_i32_1 = arith.constant 0 : i32
    return %arg1, %c0_i32, %c0_i32_0 : i32, i32, i32
  }
  func.func @transform_15(%arg0: i32, %arg1: i32) -> (i32, i32, i32) {
    %c0_i32 = arith.constant 0 : i32
    %c0_i32_0 = arith.constant 0 : i32
    %c0_i32_1 = arith.constant 0 : i32
    return %arg1, %c0_i32, %c0_i32_0 : i32, i32, i32
  }
  func.func @transform_16(%arg0: i32, %arg1: i32) -> (i32, i32, i32) {
    %c0_i32 = arith.constant 0 : i32
    %c0_i32_0 = arith.constant 0 : i32
    %c0_i32_1 = arith.constant 0 : i32
    return %arg1, %c0_i32, %c0_i32_0 : i32, i32, i32
  }
  func.func @transform_17(%arg0: i32, %arg1: i32) -> (i32, i32, i32) {
    %c0_i32 = arith.constant 0 : i32
    %c0_i32_0 = arith.constant 0 : i32
    %c0_i32_1 = arith.constant 0 : i32
    return %arg1, %c0_i32, %c0_i32_0 : i32, i32, i32
  }
  func.func @transform_18(%arg0: i32, %arg1: i32) -> (i32, i32, i32) {
    %c0_i32 = arith.constant 0 : i32
    %c0_i32_0 = arith.constant 0 : i32
    %c0_i32_1 = arith.constant 0 : i32
    return %arg1, %c0_i32, %c0_i32_0 : i32, i32, i32
  }
  func.func @transform_19(%arg0: i32, %arg1: i32) -> (i32, i32, i32) {
    %c0_i32 = arith.constant 0 : i32
    %c0_i32_0 = arith.constant 0 : i32
    %c0_i32_1 = arith.constant 0 : i32
    return %arg1, %c0_i32, %c0_i32_0 : i32, i32, i32
  }
  func.func @transform_20(%arg0: i32, %arg1: i32) -> (i32, i32, i32) {
    %c0_i32 = arith.constant 0 : i32
    %c0_i32_0 = arith.constant 0 : i32
    %c0_i32_1 = arith.constant 0 : i32
    return %arg1, %c0_i32, %c0_i32_0 : i32, i32, i32
  }
  func.func @transform_21(%arg0: i32, %arg1: i32) -> (i32, i32, i32) {
    %c0_i32 = arith.constant 0 : i32
    %c0_i32_0 = arith.constant 0 : i32
    %c0_i32_1 = arith.constant 0 : i32
    return %arg0, %c0_i32, %c0_i32_0 : i32, i32, i32
  }
}

</mosaic_0001>

<llo_original>
// kernel: vision_transformer_forward.1
$region0: #{vision_transformer_forward.1}
  #allocation0 [shape = 'u32[]', space=smem, size = 0x4, offset = 0x4, fixed_abs, tag = 'smem constant byte address 0x4 - core index']
  #allocation1 [shape = 'u32[144,128]{1,0:T(1,128)}', space=vmem, size = 0x12000, scoped, tag = 'internal scratch']
  #allocation2 [shape = 'f32[2,16,32]{2,1,0:T(8,128)}', space=vmem, size = 0x4000, scoped, tag = 'scratch operand']
  %s0 = inlined_call_operand.vmem [shape: bf16[4,16,128], index: 0, kind: input, shape index: {}]
  %s1 = inlined_call_operand.vmem [shape: f32[16,32], index: 1, kind: input, shape index: {}]
  %s2 = inlined_call_operand.vmem [shape: bf16[128,32], index: 2, kind: input, shape index: {}]
  %s3 = inlined_call_operand.vmem [shape: bf16[32,128], index: 3, kind: input, shape index: {}]
  %s4 = inlined_call_operand.vmem [shape: f32[1,128], index: 4, kind: input, shape index: {}]
  %s5 = inlined_call_operand.vmem [shape: bf16[2,32,32], index: 5, kind: input, shape index: {}]
  %s6 = inlined_call_operand.vmem [shape: f32[2,1,32], index: 6, kind: input, shape index: {}]
  %s7 = inlined_call_operand.vmem [shape: bf16[2,32,32], index: 7, kind: input, shape index: {}]
  %s8 = inlined_call_operand.vmem [shape: f32[2,1,32], index: 8, kind: input, shape index: {}]
  %s9 = inlined_call_operand.vmem [shape: bf16[2,32,32], index: 9, kind: input, shape index: {}]
  %s10 = inlined_call_operand.vmem [shape: f32[2,1,32], index: 10, kind: input, shape index: {}]
  %s11 = inlined_call_operand.vmem [shape: bf16[2,32,32], index: 11, kind: input, shape index: {}]
  %s12 = inlined_call_operand.vmem [shape: f32[2,1,32], index: 12, kind: input, shape index: {}]
  %s13 = inlined_call_operand.vmem [shape: f32[2,1,32], index: 13, kind: input, shape index: {}]
  %s14 = inlined_call_operand.vmem [shape: f32[2,1,32], index: 14, kind: input, shape index: {}]
  %s15 = inlined_call_operand.vmem [shape: bf16[2,32,128], index: 15, kind: input, shape index: {}]
  %s16 = inlined_call_operand.vmem [shape: f32[2,1,128], index: 16, kind: input, shape index: {}]
  %s17 = inlined_call_operand.vmem [shape: bf16[2,128,32], index: 17, kind: input, shape index: {}]
  %s18 = inlined_call_operand.vmem [shape: f32[2,1,32], index: 18, kind: input, shape index: {}]
  %s19 = inlined_call_operand.vmem [shape: f32[2,1,32], index: 19, kind: input, shape index: {}]
  %s20 = inlined_call_operand.vmem [shape: f32[2,1,32], index: 20, kind: input, shape index: {}]
  %s21 = inlined_call_operand.vmem [shape: f32[4,16,128], index: 21, kind: output, shape index: {}]
  %s22 = sld [smem:[#allocation0]]
  $region125: #{vision_transformer_forward.1} parent=0
    _
  %s24 = ssub.s32 1, %s22
  %s25 = scalar_select 0, %s24, %s22
  loop: start=0, step=1, limit=6
  $region2: #{vision_transformer_forward.1} parent=0 // loop_pre_header
    _
  $region3: #{vision_transformer_forward.1} parent=0 // loop_header
    %s27 = sphi 0, %s31
    %p28 = scmp.ge.s32.totalorder %s27, 6
    %s34 = sphi 0, %s46
    %s35 = sphi 0, %s42
    %s36 = sphi 0, %s34
    %s37 = sphi 0, %s35
    %s38 = sphi 0, %s36
    %s39 = sphi 0, %s37
    %s49 = sphi 0, %s51
    %s52 = sphi 0, %s49
    %s53 = sphi 0, %s52
    %s69 = sphi 0, %s53
    %s73 = sphi 0, %s73
    %s75 = sphi 0, %s73
    %s76 = sphi 0, %s75
    %s90 = sphi 0, %s76
    %s94 = sphi 0, %s94
    %s96 = sphi 0, %s94
    %s97 = sphi 0, %s96
    %s111 = sphi 0, %s97
    %s115 = sphi 0, %s115
    %s117 = sphi 0, %s115
    %s118 = sphi 0, %s117
    %s132 = sphi 0, %s118
    %s136 = sphi 0, %s136
    %s138 = sphi 0, %s136
    %s139 = sphi 0, %s138
    %s153 = sphi 0, %s139
    %s159 = sphi 0, %s161
    %s162 = sphi 0, %s159
    %s163 = sphi 0, %s162
    %s179 = sphi 0, %s163
    %s185 = sphi 0, %s187
    %s188 = sphi 0, %s185
    %s189 = sphi 0, %s188
    %s205 = sphi 0, %s189
    %s211 = sphi 0, %s213
    %s214 = sphi 0, %s211
    %s215 = sphi 0, %s214
    %s231 = sphi 0, %s215
    %s237 = sphi 0, %s239
    %s240 = sphi 0, %s237
    %s241 = sphi 0, %s240
    %s257 = sphi 0, %s241
    %s263 = sphi 0, %s265
    %s266 = sphi 0, %s263
    %s267 = sphi 0, %s266
    %s283 = sphi 0, %s267
    %s289 = sphi 0, %s291
    %s292 = sphi 0, %s289
    %s293 = sphi 0, %s292
    %s309 = sphi 0, %s293
    %s315 = sphi 0, %s317
    %s318 = sphi 0, %s315
    %s319 = sphi 0, %s318
    %s335 = sphi 0, %s319
    %s341 = sphi 0, %s343
    %s344 = sphi 0, %s341
    %s345 = sphi 0, %s344
    %s361 = sphi 0, %s345
    %s367 = sphi 0, %s369
    %s370 = sphi 0, %s367
    %s371 = sphi 0, %s370
    %s387 = sphi 0, %s371
    %s393 = sphi 0, %s395
    %s396 = sphi 0, %s393
    %s397 = sphi 0, %s396
    %s413 = sphi 0, %s397
    %s419 = sphi 0, %s421
    %s422 = sphi 0, %s419
    %s423 = sphi 0, %s422
    %s439 = sphi 0, %s423
    %s445 = sphi 0, %s447
    %s448 = sphi 0, %s445
    %s449 = sphi 0, %s448
    %s465 = sphi 0, %s449
    %s471 = sphi 0, %s473
    %s474 = sphi 0, %s471
    %s475 = sphi 0, %s474
    %s491 = sphi 0, %s475
    %s497 = sphi 0, %s499
    %s500 = sphi 0, %s497
    %s501 = sphi 0, %s500
    %s517 = sphi 0, %s501
    %s523 = sphi 0, %s525
    %s526 = sphi 0, %s523
    %s527 = sphi 0, %s526
    %s543 = sphi 0, %s527
    %s549 = sphi 0, %s551
    %s552 = sphi 0, %s549
    %s553 = sphi 0, %s552
    %s569 = sphi 0, %s553
    %s575 = sphi 0, %s577
    %s578 = sphi 0, %s575
    %s579 = sphi 0, %s578
    %s595 = sphi 0, %s579
  $region4: #{vision_transformer_forward.1} parent=0 // loop_header_branch
    %30 = sbr.rel (%p28) target = $region8
  $region5: #{vision_transformer_forward.1} parent=0 // loop_body
    %s32 = ssub.s32 %s27, 1
    %s33 = ssub.s32 %s27, 2
    %s40 = sadd.s32 1, %s35
    %p41 = scmp.ge.s32.totalorder %s40, 2
    %s42 = scalar_select %p41, 0, %s40
    %s43 = sadd.s32 1, %s34
    %s44 = scalar_select %p41, %s43, %s34
    %p45 = scmp.ge.s32.totalorder %s44, 2
    %s46 = scalar_select %p45, 0, %s44
    %s47 = ssub.s32 %s34, %s46
    %p48 = scmp.eq.s32.totalorder %s47, 0
    %s50 = sadd.s32 %s49, 1
    %s51 = scalar_select %p48, %s49, %s50
    %p54 = pneg %p48
    %p55 = scmp.eq.s32.totalorder %s27, 3
    %p56 = por %p54, %p55
    %p57 = scmp.ne.s32.totalorder %s49, %s52
    %p58 = scmp.eq.s32.totalorder %s27, 0
    %p59 = por %p57, %p58
    %p60 = scmp.ne.s32.totalorder %s49, %s52
    %p61 = scmp.eq.s32.totalorder %s32, 3
    %p62 = por %p60, %p61
    %p63 = scmp.ne.s32.totalorder %s52, %s53
    %p64 = scmp.eq.s32.totalorder %s32, 0
    %p65 = por %p63, %p64
    %p66 = scmp.ne.s32.totalorder %s52, %s53
    %p67 = scmp.eq.s32.totalorder %s33, 3
    %p68 = por %p66, %p67
    %p70 = scmp.ne.s32.totalorder %s53, %s69
    %p71 = scmp.eq.s32.totalorder %s33, 0
    %p72 = por %p70, %p71
    %s74 = sadd.s32 %s73, 1
    %p77 = scmp.eq.s32.totalorder %s27, 3
    %p78 = scmp.ne.s32.totalorder %s73, %s75
    %p79 = scmp.eq.s32.totalorder %s27, 0
    %p80 = por %p78, %p79
    %p81 = scmp.ne.s32.totalorder %s73, %s75
    %p82 = scmp.eq.s32.totalorder %s32, 3
    %p83 = por %p81, %p82
    %p84 = scmp.ne.s32.totalorder %s75, %s76
    %p85 = scmp.eq.s32.totalorder %s32, 0
    %p86 = por %p84, %p85
    %p87 = scmp.ne.s32.totalorder %s75, %s76
    %p88 = scmp.eq.s32.totalorder %s33, 3
    %p89 = por %p87, %p88
    %p91 = scmp.ne.s32.totalorder %s76, %s90
    %p92 = scmp.eq.s32.totalorder %s33, 0
    %p93 = por %p91, %p92
    %s95 = sadd.s32 %s94, 1
    %p98 = scmp.eq.s32.totalorder %s27, 3
    %p99 = scmp.ne.s32.totalorder %s94, %s96
    %p100 = scmp.eq.s32.totalorder %s27, 0
    %p101 = por %p99, %p100
    %p102 = scmp.ne.s32.totalorder %s94, %s96
    %p103 = scmp.eq.s32.totalorder %s32, 3
    %p104 = por %p102, %p103
    %p105 = scmp.ne.s32.totalorder %s96, %s97
    %p106 = scmp.eq.s32.totalorder %s32, 0
    %p107 = por %p105, %p106
    %p108 = scmp.ne.s32.totalorder %s96, %s97
    %p109 = scmp.eq.s32.totalorder %s33, 3
    %p110 = por %p108, %p109
    %p112 = scmp.ne.s32.totalorder %s97, %s111
    %p113 = scmp.eq.s32.totalorder %s33, 0
    %p114 = por %p112, %p113
    %s116 = sadd.s32 %s115, 1
    %p119 = scmp.eq.s32.totalorder %s27, 3
    %p120 = scmp.ne.s32.totalorder %s115, %s117
    %p121 = scmp.eq.s32.totalorder %s27, 0
    %p122 = por %p120, %p121
    %p123 = scmp.ne.s32.totalorder %s115, %s117
    %p124 = scmp.eq.s32.totalorder %s32, 3
    %p125 = por %p123, %p124
    %p126 = scmp.ne.s32.totalorder %s117, %s118
    %p127 = scmp.eq.s32.totalorder %s32, 0
    %p128 = por %p126, %p127
    %p129 = scmp.ne.s32.totalorder %s117, %s118
    %p130 = scmp.eq.s32.totalorder %s33, 3
    %p131 = por %p129, %p130
    %p133 = scmp.ne.s32.totalorder %s118, %s132
    %p134 = scmp.eq.s32.totalorder %s33, 0
    %p135 = por %p133, %p134
    %s137 = sadd.s32 %s136, 1
    %p140 = scmp.eq.s32.totalorder %s27, 3
    %p141 = scmp.ne.s32.totalorder %s136, %s138
    %p142 = scmp.eq.s32.totalorder %s27, 0
    %p143 = por %p141, %p142
    %p144 = scmp.ne.s32.totalorder %s136, %s138
    %p145 = scmp.eq.s32.totalorder %s32, 3
    %p146 = por %p144, %p145
    %p147 = scmp.ne.s32.totalorder %s138, %s139
    %p148 = scmp.eq.s32.totalorder %s32, 0
    %p149 = por %p147, %p148
    %p150 = scmp.ne.s32.totalorder %s138, %s139
    %p151 = scmp.eq.s32.totalorder %s33, 3
    %p152 = por %p150, %p151
    %p154 = scmp.ne.s32.totalorder %s139, %s153
    %p155 = scmp.eq.s32.totalorder %s33, 0
    %p156 = por %p154, %p155
    %s157 = ssub.s32 %s35, %s42
    %p158 = scmp.eq.s32.totalorder %s157, 0
    %s160 = sadd.s32 %s159, 1
    %s161 = scalar_select %p158, %s159, %s160
    %p164 = pneg %p158
    %p165 = scmp.eq.s32.totalorder %s27, 3
    %p166 = por %p164, %p165
    %p167 = scmp.ne.s32.totalorder %s159, %s162
    %p168 = scmp.eq.s32.totalorder %s27, 0
    %p169 = por %p167, %p168
    %p170 = scmp.ne.s32.totalorder %s159, %s162
    %p171 = scmp.eq.s32.totalorder %s32, 3
    %p172 = por %p170, %p171
    %p173 = scmp.ne.s32.totalorder %s162, %s163
    %p174 = scmp.eq.s32.totalorder %s32, 0
    %p175 = por %p173, %p174
    %p176 = scmp.ne.s32.totalorder %s162, %s163
    %p177 = scmp.eq.s32.totalorder %s33, 3
    %p178 = por %p176, %p177
    %p180 = scmp.ne.s32.totalorder %s163, %s179
    %p181 = scmp.eq.s32.totalorder %s33, 0
    %p182 = por %p180, %p181
    %s183 = ssub.s32 %s35, %s42
    %p184 = scmp.eq.s32.totalorder %s183, 0
    %s186 = sadd.s32 %s185, 1
    %s187 = scalar_select %p184, %s185, %s186
    %p190 = pneg %p184
    %p191 = scmp.eq.s32.totalorder %s27, 3
    %p192 = por %p190, %p191
    %p193 = scmp.ne.s32.totalorder %s185, %s188
    %p194 = scmp.eq.s32.totalorder %s27, 0
    %p195 = por %p193, %p194
    %p196 = scmp.ne.s32.totalorder %s185, %s188
    %p197 = scmp.eq.s32.totalorder %s32, 3
    %p198 = por %p196, %p197
    %p199 = scmp.ne.s32.totalorder %s188, %s189
    %p200 = scmp.eq.s32.totalorder %s32, 0
    %p201 = por %p199, %p200
    %p202 = scmp.ne.s32.totalorder %s188, %s189
    %p203 = scmp.eq.s32.totalorder %s33, 3
    %p204 = por %p202, %p203
    %p206 = scmp.ne.s32.totalorder %s189, %s205
    %p207 = scmp.eq.s32.totalorder %s33, 0
    %p208 = por %p206, %p207
    %s209 = ssub.s32 %s35, %s42
    %p210 = scmp.eq.s32.totalorder %s209, 0
    %s212 = sadd.s32 %s211, 1
    %s213 = scalar_select %p210, %s211, %s212
    %p216 = pneg %p210
    %p217 = scmp.eq.s32.totalorder %s27, 3
    %p218 = por %p216, %p217
    %p219 = scmp.ne.s32.totalorder %s211, %s214
    %p220 = scmp.eq.s32.totalorder %s27, 0
    %p221 = por %p219, %p220
    %p222 = scmp.ne.s32.totalorder %s211, %s214
    %p223 = scmp.eq.s32.totalorder %s32, 3
    %p224 = por %p222, %p223
    %p225 = scmp.ne.s32.totalorder %s214, %s215
    %p226 = scmp.eq.s32.totalorder %s32, 0
    %p227 = por %p225, %p226
    %p228 = scmp.ne.s32.totalorder %s214, %s215
    %p229 = scmp.eq.s32.totalorder %s33, 3
    %p230 = por %p228, %p229
    %p232 = scmp.ne.s32.totalorder %s215, %s231
    %p233 = scmp.eq.s32.totalorder %s33, 0
    %p234 = por %p232, %p233
    %s235 = ssub.s32 %s35, %s42
    %p236 = scmp.eq.s32.totalorder %s235, 0
    %s238 = sadd.s32 %s237, 1
    %s239 = scalar_select %p236, %s237, %s238
    %p242 = pneg %p236
    %p243 = scmp.eq.s32.totalorder %s27, 3
    %p244 = por %p242, %p243
    %p245 = scmp.ne.s32.totalorder %s237, %s240
    %p246 = scmp.eq.s32.totalorder %s27, 0
    %p247 = por %p245, %p246
    %p248 = scmp.ne.s32.totalorder %s237, %s240
    %p249 = scmp.eq.s32.totalorder %s32, 3
    %p250 = por %p248, %p249
    %p251 = scmp.ne.s32.totalorder %s240, %s241
    %p252 = scmp.eq.s32.totalorder %s32, 0
    %p253 = por %p251, %p252
    %p254 = scmp.ne.s32.totalorder %s240, %s241
    %p255 = scmp.eq.s32.totalorder %s33, 3
    %p256 = por %p254, %p255
    %p258 = scmp.ne.s32.totalorder %s241, %s257
    %p259 = scmp.eq.s32.totalorder %s33, 0
    %p260 = por %p258, %p259
    %s261 = ssub.s32 %s35, %s42
    %p262 = scmp.eq.s32.totalorder %s261, 0
    %s264 = sadd.s32 %s263, 1
    %s265 = scalar_select %p262, %s263, %s264
    %p268 = pneg %p262
    %p269 = scmp.eq.s32.totalorder %s27, 3
    %p270 = por %p268, %p269
    %p271 = scmp.ne.s32.totalorder %s263, %s266
    %p272 = scmp.eq.s32.totalorder %s27, 0
    %p273 = por %p271, %p272
    %p274 = scmp.ne.s32.totalorder %s263, %s266
    %p275 = scmp.eq.s32.totalorder %s32, 3
    %p276 = por %p274, %p275
    %p277 = scmp.ne.s32.totalorder %s266, %s267
    %p278 = scmp.eq.s32.totalorder %s32, 0
    %p279 = por %p277, %p278
    %p280 = scmp.ne.s32.totalorder %s266, %s267
    %p281 = scmp.eq.s32.totalorder %s33, 3
    %p282 = por %p280, %p281
    %p284 = scmp.ne.s32.totalorder %s267, %s283
    %p285 = scmp.eq.s32.totalorder %s33, 0
    %p286 = por %p284, %p285
    %s287 = ssub.s32 %s35, %s42
    %p288 = scmp.eq.s32.totalorder %s287, 0
    %s290 = sadd.s32 %s289, 1
    %s291 = scalar_select %p288, %s289, %s290
    %p294 = pneg %p288
    %p295 = scmp.eq.s32.totalorder %s27, 3
    %p296 = por %p294, %p295
    %p297 = scmp.ne.s32.totalorder %s289, %s292
    %p298 = scmp.eq.s32.totalorder %s27, 0
    %p299 = por %p297, %p298
    %p300 = scmp.ne.s32.totalorder %s289, %s292
    %p301 = scmp.eq.s32.totalorder %s32, 3
    %p302 = por %p300, %p301
    %p303 = scmp.ne.s32.totalorder %s292, %s293
    %p304 = scmp.eq.s32.totalorder %s32, 0
    %p305 = por %p303, %p304
    %p306 = scmp.ne.s32.totalorder %s292, %s293
    %p307 = scmp.eq.s32.totalorder %s33, 3
    %p308 = por %p306, %p307
    %p310 = scmp.ne.s32.totalorder %s293, %s309
    %p311 = scmp.eq.s32.totalorder %s33, 0
    %p312 = por %p310, %p311
    %s313 = ssub.s32 %s35, %s42
    %p314 = scmp.eq.s32.totalorder %s313, 0
    %s316 = sadd.s32 %s315, 1
    %s317 = scalar_select %p314, %s315, %s316
    %p320 = pneg %p314
    %p321 = scmp.eq.s32.totalorder %s27, 3
    %p322 = por %p320, %p321
    %p323 = scmp.ne.s32.totalorder %s315, %s318
    %p324 = scmp.eq.s32.totalorder %s27, 0
    %p325 = por %p323, %p324
    %p326 = scmp.ne.s32.totalorder %s315, %s318
    %p327 = scmp.eq.s32.totalorder %s32, 3
    %p328 = por %p326, %p327
    %p329 = scmp.ne.s32.totalorder %s318, %s319
    %p330 = scmp.eq.s32.totalorder %s32, 0
    %p331 = por %p329, %p330
    %p332 = scmp.ne.s32.totalorder %s318, %s319
    %p333 = scmp.eq.s32.totalorder %s33, 3
    %p334 = por %p332, %p333
    %p336 = scmp.ne.s32.totalorder %s319, %s335
    %p337 = scmp.eq.s32.totalorder %s33, 0
    %p338 = por %p336, %p337
    %s339 = ssub.s32 %s35, %s42
    %p340 = scmp.eq.s32.totalorder %s339, 0
    %s342 = sadd.s32 %s341, 1
    %s343 = scalar_select %p340, %s341, %s342
    %p346 = pneg %p340
    %p347 = scmp.eq.s32.totalorder %s27, 3
    %p348 = por %p346, %p347
    %p349 = scmp.ne.s32.totalorder %s341, %s344
    %p350 = scmp.eq.s32.totalorder %s27, 0
    %p351 = por %p349, %p350
    %p352 = scmp.ne.s32.totalorder %s341, %s344
    %p353 = scmp.eq.s32.totalorder %s32, 3
    %p354 = por %p352, %p353
    %p355 = scmp.ne.s32.totalorder %s344, %s345
    %p356 = scmp.eq.s32.totalorder %s32, 0
    %p357 = por %p355, %p356
    %p358 = scmp.ne.s32.totalorder %s344, %s345
    %p359 = scmp.eq.s32.totalorder %s33, 3
    %p360 = por %p358, %p359
    %p362 = scmp.ne.s32.totalorder %s345, %s361
    %p363 = scmp.eq.s32.totalorder %s33, 0
    %p364 = por %p362, %p363
    %s365 = ssub.s32 %s35, %s42
    %p366 = scmp.eq.s32.totalorder %s365, 0
    %s368 = sadd.s32 %s367, 1
    %s369 = scalar_select %p366, %s367, %s368
    %p372 = pneg %p366
    %p373 = scmp.eq.s32.totalorder %s27, 3
    %p374 = por %p372, %p373
    %p375 = scmp.ne.s32.totalorder %s367, %s370
    %p376 = scmp.eq.s32.totalorder %s27, 0
    %p377 = por %p375, %p376
    %p378 = scmp.ne.s32.totalorder %s367, %s370
    %p379 = scmp.eq.s32.totalorder %s32, 3
    %p380 = por %p378, %p379
    %p381 = scmp.ne.s32.totalorder %s370, %s371
    %p382 = scmp.eq.s32.totalorder %s32, 0
    %p383 = por %p381, %p382
    %p384 = scmp.ne.s32.totalorder %s370, %s371
    %p385 = scmp.eq.s32.totalorder %s33, 3
    %p386 = por %p384, %p385
    %p388 = scmp.ne.s32.totalorder %s371, %s387
    %p389 = scmp.eq.s32.totalorder %s33, 0
    %p390 = por %p388, %p389
    %s391 = ssub.s32 %s35, %s42
    %p392 = scmp.eq.s32.totalorder %s391, 0
    %s394 = sadd.s32 %s393, 1
    %s395 = scalar_select %p392, %s393, %s394
    %p398 = pneg %p392
    %p399 = scmp.eq.s32.totalorder %s27, 3
    %p400 = por %p398, %p399
    %p401 = scmp.ne.s32.totalorder %s393, %s396
    %p402 = scmp.eq.s32.totalorder %s27, 0
    %p403 = por %p401, %p402
    %p404 = scmp.ne.s32.totalorder %s393, %s396
    %p405 = scmp.eq.s32.totalorder %s32, 3
    %p406 = por %p404, %p405
    %p407 = scmp.ne.s32.totalorder %s396, %s397
    %p408 = scmp.eq.s32.totalorder %s32, 0
    %p409 = por %p407, %p408
    %p410 = scmp.ne.s32.totalorder %s396, %s397
    %p411 = scmp.eq.s32.totalorder %s33, 3
    %p412 = por %p410, %p411
    %p414 = scmp.ne.s32.totalorder %s397, %s413
    %p415 = scmp.eq.s32.totalorder %s33, 0
    %p416 = por %p414, %p415
    %s417 = ssub.s32 %s35, %s42
    %p418 = scmp.eq.s32.totalorder %s417, 0
    %s420 = sadd.s32 %s419, 1
    %s421 = scalar_select %p418, %s419, %s420
    %p424 = pneg %p418
    %p425 = scmp.eq.s32.totalorder %s27, 3
    %p426 = por %p424, %p425
    %p427 = scmp.ne.s32.totalorder %s419, %s422
    %p428 = scmp.eq.s32.totalorder %s27, 0
    %p429 = por %p427, %p428
    %p430 = scmp.ne.s32.totalorder %s419, %s422
    %p431 = scmp.eq.s32.totalorder %s32, 3
    %p432 = por %p430, %p431
    %p433 = scmp.ne.s32.totalorder %s422, %s423
    %p434 = scmp.eq.s32.totalorder %s32, 0
    %p435 = por %p433, %p434
    %p436 = scmp.ne.s32.totalorder %s422, %s423
    %p437 = scmp.eq.s32.totalorder %s33, 3
    %p438 = por %p436, %p437
    %p440 = scmp.ne.s32.totalorder %s423, %s439
    %p441 = scmp.eq.s32.totalorder %s33, 0
    %p442 = por %p440, %p441
    %s443 = ssub.s32 %s35, %s42
    %p444 = scmp.eq.s32.totalorder %s443, 0
    %s446 = sadd.s32 %s445, 1
    %s447 = scalar_select %p444, %s445, %s446
    %p450 = pneg %p444
    %p451 = scmp.eq.s32.totalorder %s27, 3
    %p452 = por %p450, %p451
    %p453 = scmp.ne.s32.totalorder %s445, %s448
    %p454 = scmp.eq.s32.totalorder %s27, 0
    %p455 = por %p453, %p454
    %p456 = scmp.ne.s32.totalorder %s445, %s448
    %p457 = scmp.eq.s32.totalorder %s32, 3
    %p458 = por %p456, %p457
    %p459 = scmp.ne.s32.totalorder %s448, %s449
    %p460 = scmp.eq.s32.totalorder %s32, 0
    %p461 = por %p459, %p460
    %p462 = scmp.ne.s32.totalorder %s448, %s449
    %p463 = scmp.eq.s32.totalorder %s33, 3
    %p464 = por %p462, %p463
    %p466 = scmp.ne.s32.totalorder %s449, %s465
    %p467 = scmp.eq.s32.totalorder %s33, 0
    %p468 = por %p466, %p467
    %s469 = ssub.s32 %s35, %s42
    %p470 = scmp.eq.s32.totalorder %s469, 0
    %s472 = sadd.s32 %s471, 1
    %s473 = scalar_select %p470, %s471, %s472
    %p476 = pneg %p470
    %p477 = scmp.eq.s32.totalorder %s27, 3
    %p478 = por %p476, %p477
    %p479 = scmp.ne.s32.totalorder %s471, %s474
    %p480 = scmp.eq.s32.totalorder %s27, 0
    %p481 = por %p479, %p480
    %p482 = scmp.ne.s32.totalorder %s471, %s474
    %p483 = scmp.eq.s32.totalorder %s32, 3
    %p484 = por %p482, %p483
    %p485 = scmp.ne.s32.totalorder %s474, %s475
    %p486 = scmp.eq.s32.totalorder %s32, 0
    %p487 = por %p485, %p486
    %p488 = scmp.ne.s32.totalorder %s474, %s475
    %p489 = scmp.eq.s32.totalorder %s33, 3
    %p490 = por %p488, %p489
    %p492 = scmp.ne.s32.totalorder %s475, %s491
    %p493 = scmp.eq.s32.totalorder %s33, 0
    %p494 = por %p492, %p493
    %s495 = ssub.s32 %s35, %s42
    %p496 = scmp.eq.s32.totalorder %s495, 0
    %s498 = sadd.s32 %s497, 1
    %s499 = scalar_select %p496, %s497, %s498
    %p502 = pneg %p496
    %p503 = scmp.eq.s32.totalorder %s27, 3
    %p504 = por %p502, %p503
    %p505 = scmp.ne.s32.totalorder %s497, %s500
    %p506 = scmp.eq.s32.totalorder %s27, 0
    %p507 = por %p505, %p506
    %p508 = scmp.ne.s32.totalorder %s497, %s500
    %p509 = scmp.eq.s32.totalorder %s32, 3
    %p510 = por %p508, %p509
    %p511 = scmp.ne.s32.totalorder %s500, %s501
    %p512 = scmp.eq.s32.totalorder %s32, 0
    %p513 = por %p511, %p512
    %p514 = scmp.ne.s32.totalorder %s500, %s501
    %p515 = scmp.eq.s32.totalorder %s33, 3
    %p516 = por %p514, %p515
    %p518 = scmp.ne.s32.totalorder %s501, %s517
    %p519 = scmp.eq.s32.totalorder %s33, 0
    %p520 = por %p518, %p519
    %s521 = ssub.s32 %s35, %s42
    %p522 = scmp.eq.s32.totalorder %s521, 0
    %s524 = sadd.s32 %s523, 1
    %s525 = scalar_select %p522, %s523, %s524
    %p528 = pneg %p522
    %p529 = scmp.eq.s32.totalorder %s27, 3
    %p530 = por %p528, %p529
    %p531 = scmp.ne.s32.totalorder %s523, %s526
    %p532 = scmp.eq.s32.totalorder %s27, 0
    %p533 = por %p531, %p532
    %p534 = scmp.ne.s32.totalorder %s523, %s526
    %p535 = scmp.eq.s32.totalorder %s32, 3
    %p536 = por %p534, %p535
    %p537 = scmp.ne.s32.totalorder %s526, %s527
    %p538 = scmp.eq.s32.totalorder %s32, 0
    %p539 = por %p537, %p538
    %p540 = scmp.ne.s32.totalorder %s526, %s527
    %p541 = scmp.eq.s32.totalorder %s33, 3
    %p542 = por %p540, %p541
    %p544 = scmp.ne.s32.totalorder %s527, %s543
    %p545 = scmp.eq.s32.totalorder %s33, 0
    %p546 = por %p544, %p545
    %s547 = ssub.s32 %s35, %s42
    %p548 = scmp.eq.s32.totalorder %s547, 0
    %s550 = sadd.s32 %s549, 1
    %s551 = scalar_select %p548, %s549, %s550
    %p554 = pneg %p548
    %p555 = scmp.eq.s32.totalorder %s27, 3
    %p556 = por %p554, %p555
    %p557 = scmp.ne.s32.totalorder %s549, %s552
    %p558 = scmp.eq.s32.totalorder %s27, 0
    %p559 = por %p557, %p558
    %p560 = scmp.ne.s32.totalorder %s549, %s552
    %p561 = scmp.eq.s32.totalorder %s32, 3
    %p562 = por %p560, %p561
    %p563 = scmp.ne.s32.totalorder %s552, %s553
    %p564 = scmp.eq.s32.totalorder %s32, 0
    %p565 = por %p563, %p564
    %p566 = scmp.ne.s32.totalorder %s552, %s553
    %p567 = scmp.eq.s32.totalorder %s33, 3
    %p568 = por %p566, %p567
    %p570 = scmp.ne.s32.totalorder %s553, %s569
    %p571 = scmp.eq.s32.totalorder %s33, 0
    %p572 = por %p570, %p571
    %s573 = ssub.s32 %s34, %s46
    %p574 = scmp.eq.s32.totalorder %s573, 0
    %s576 = sadd.s32 %s575, 1
    %s577 = scalar_select %p574, %s575, %s576
    %p580 = pneg %p574
    %p581 = scmp.eq.s32.totalorder %s27, 3
    %p582 = por %p580, %p581
    %p583 = scmp.ne.s32.totalorder %s575, %s578
    %p584 = scmp.eq.s32.totalorder %s27, 0
    %p585 = por %p583, %p584
    %p586 = scmp.ne.s32.totalorder %s575, %s578
    %p587 = scmp.eq.s32.totalorder %s32, 3
    %p588 = por %p586, %p587
    %p589 = scmp.ne.s32.totalorder %s578, %s579
    %p590 = scmp.eq.s32.totalorder %s32, 0
    %p591 = por %p589, %p590
    %p592 = scmp.ne.s32.totalorder %s578, %s579
    %p593 = scmp.eq.s32.totalorder %s33, 3
    %p594 = por %p592, %p593
    %p596 = scmp.ne.s32.totalorder %s579, %s595
    %p597 = scmp.eq.s32.totalorder %s33, 0
    %p598 = por %p596, %p597
    %p599 = scmp.le.s32.totalorder 1, %s27
    %p600 = scmp.lt.s32.totalorder %s27, 5
    %p601 = pnand %p599, %p600
    %p602 = pneg %p601
    // Predicated region
    $region9: #{vision_transformer_forward.1} parent=5 // pred_check
      _
    $region10: #{vision_transformer_forward.1} parent=5 // pred_check_branch
      %604 = sbr.rel (%p601) target = $region12
    $region11: #{vision_transformer_forward.1} parent=5 // pred_region
      %s605 = ssub.s32 %s27, 1
      // Predicated region
      $region13: #{vision_transformer_forward.1} parent=11 // pred_check
        %p606 = pneg %p86
      $region14: #{vision_transformer_forward.1} parent=11 // pred_check_branch
        %608 = sbr.rel (%p606) target = $region16
      $region15: #{vision_transformer_forward.1} parent=11 // pred_region
        _
      $region16: #{vision_transformer_forward.1} parent=11 // pred_fallthru
        _
      // Predicated region
      $region17: #{vision_transformer_forward.1} parent=11 // pred_check
        %p609 = pneg %p107
      $region18: #{vision_transformer_forward.1} parent=11 // pred_check_branch
        %611 = sbr.rel (%p609) target = $region20
      $region19: #{vision_transformer_forward.1} parent=11 // pred_region
        _
      $region20: #{vision_transformer_forward.1} parent=11 // pred_fallthru
        _
      // Predicated region
      $region21: #{vision_transformer_forward.1} parent=11 // pred_check
        %p612 = pneg %p128
      $region22: #{vision_transformer_forward.1} parent=11 // pred_check_branch
        %614 = sbr.rel (%p612) target = $region24
      $region23: #{vision_transformer_forward.1} parent=11 // pred_region
        _
      $region24: #{vision_transformer_forward.1} parent=11 // pred_fallthru
        _
      // Predicated region
      $region25: #{vision_transformer_forward.1} parent=11 // pred_check
        %p615 = pneg %p149
      $region26: #{vision_transformer_forward.1} parent=11 // pred_check_branch
        %617 = sbr.rel (%p615) target = $region28
      $region27: #{vision_transformer_forward.1} parent=11 // pred_region
        _
      $region28: #{vision_transformer_forward.1} parent=11 // pred_fallthru
        _
    $region12: #{vision_transformer_forward.1} parent=5 // pred_fallthru
      _
    %p618 = scmp.lt.s32.totalorder %s27, 4
    // Predicated region
    $region29: #{vision_transformer_forward.1} parent=5 // pred_check
      %p619 = pneg %p618
    $region30: #{vision_transformer_forward.1} parent=5 // pred_check_branch
      %621 = sbr.rel (%p619) target = $region32
    $region31: #{vision_transformer_forward.1} parent=5 // pred_region
      // Predicated region
      $region33: #{vision_transformer_forward.1} parent=31 // pred_check
        %p622 = pneg %p59
      $region34: #{vision_transformer_forward.1} parent=31 // pred_check_branch
        %624 = sbr.rel (%p622) target = $region36
      $region35: #{vision_transformer_forward.1} parent=31 // pred_region
        %s625 = smul.u32 2, %s34
        %p626 = scmp.lt.s32.totalorder %s625, 3
        %s627 = scalar_select %p626, %s625, 3
        %s628 = smul.addr %s627, 2
        %s629 = smul.addr %s628, 4
        %s630 = scalar_lea.vmem %s0, %s629
        %s631 = smul.u32 2, %s34
      $region36: #{vision_transformer_forward.1} parent=31 // pred_fallthru
        _
      // Predicated region
      $region37: #{vision_transformer_forward.1} parent=31 // pred_check
        %p632 = pneg %p169
      $region38: #{vision_transformer_forward.1} parent=31 // pred_check_branch
        %634 = sbr.rel (%p632) target = $region40
      $region39: #{vision_transformer_forward.1} parent=31 // pred_region
        %p635 = scmp.lt.s32.totalorder %s35, 1
        %s636 = scalar_select %p635, %s35, 1
        %s637 = smul.addr %s636, 4
        %s638 = smul.addr %s637, 4
        %s639 = scalar_lea.vmem %s5, %s638
      $region40: #{vision_transformer_forward.1} parent=31 // pred_fallthru
        _
      // Predicated region
      $region41: #{vision_transformer_forward.1} parent=31 // pred_check
        %p640 = pneg %p195
      $region42: #{vision_transformer_forward.1} parent=31 // pred_check_branch
        %642 = sbr.rel (%p640) target = $region44
      $region43: #{vision_transformer_forward.1} parent=31 // pred_region
        %p643 = scmp.lt.s32.totalorder %s35, 1
        %s644 = scalar_select %p643, %s35, 1
        %s645 = scalar_lea.vmem %s6, %s644
      $region44: #{vision_transformer_forward.1} parent=31 // pred_fallthru
        _
      // Predicated region
      $region45: #{vision_transformer_forward.1} parent=31 // pred_check
        %p646 = pneg %p221
      $region46: #{vision_transformer_forward.1} parent=31 // pred_check_branch
        %648 = sbr.rel (%p646) target = $region48
      $region47: #{vision_transformer_forward.1} parent=31 // pred_region
        %p649 = scmp.lt.s32.totalorder %s35, 1
        %s650 = scalar_select %p649, %s35, 1
        %s651 = smul.addr %s650, 4
        %s652 = smul.addr %s651, 4
        %s653 = scalar_lea.vmem %s7, %s652
      $region48: #{vision_transformer_forward.1} parent=31 // pred_fallthru
        _
      // Predicated region
      $region49: #{vision_transformer_forward.1} parent=31 // pred_check
        %p654 = pneg %p247
      $region50: #{vision_transformer_forward.1} parent=31 // pred_check_branch
        %656 = sbr.rel (%p654) target = $region52
      $region51: #{vision_transformer_forward.1} parent=31 // pred_region
        %p657 = scmp.lt.s32.totalorder %s35, 1
        %s658 = scalar_select %p657, %s35, 1
        %s659 = scalar_lea.vmem %s8, %s658
      $region52: #{vision_transformer_forward.1} parent=31 // pred_fallthru
        _
      // Predicated region
      $region53: #{vision_transformer_forward.1} parent=31 // pred_check
        %p660 = pneg %p273
      $region54: #{vision_transformer_forward.1} parent=31 // pred_check_branch
        %662 = sbr.rel (%p660) target = $region56
      $region55: #{vision_transformer_forward.1} parent=31 // pred_region
        %p663 = scmp.lt.s32.totalorder %s35, 1
        %s664 = scalar_select %p663, %s35, 1
        %s665 = smul.addr %s664, 4
        %s666 = smul.addr %s665, 4
        %s667 = scalar_lea.vmem %s9, %s666
      $region56: #{vision_transformer_forward.1} parent=31 // pred_fallthru
        _
      // Predicated region
      $region57: #{vision_transformer_forward.1} parent=31 // pred_check
        %p668 = pneg %p299
      $region58: #{vision_transformer_forward.1} parent=31 // pred_check_branch
        %670 = sbr.rel (%p668) target = $region60
      $region59: #{vision_transformer_forward.1} parent=31 // pred_region
        %p671 = scmp.lt.s32.totalorder %s35, 1
        %s672 = scalar_select %p671, %s35, 1
        %s673 = scalar_lea.vmem %s10, %s672
      $region60: #{vision_transformer_forward.1} parent=31 // pred_fallthru
        _
      // Predicated region
      $region61: #{vision_transformer_forward.1} parent=31 // pred_check
        %p674 = pneg %p325
      $region62: #{vision_transformer_forward.1} parent=31 // pred_check_branch
        %676 = sbr.rel (%p674) target = $region64
      $region63: #{vision_transformer_forward.1} parent=31 // pred_region
        %p677 = scmp.lt.s32.totalorder %s35, 1
        %s678 = scalar_select %p677, %s35, 1
        %s679 = smul.addr %s678, 4
        %s680 = smul.addr %s679, 4
        %s681 = scalar_lea.vmem %s11, %s680
      $region64: #{vision_transformer_forward.1} parent=31 // pred_fallthru
        _
      // Predicated region
      $region65: #{vision_transformer_forward.1} parent=31 // pred_check
        %p682 = pneg %p351
      $region66: #{vision_transformer_forward.1} parent=31 // pred_check_branch
        %684 = sbr.rel (%p682) target = $region68
      $region67: #{vision_transformer_forward.1} parent=31 // pred_region
        %p685 = scmp.lt.s32.totalorder %s35, 1
        %s686 = scalar_select %p685, %s35, 1
        %s687 = scalar_lea.vmem %s12, %s686
      $region68: #{vision_transformer_forward.1} parent=31 // pred_fallthru
        _
      // Predicated region
      $region69: #{vision_transformer_forward.1} parent=31 // pred_check
        %p688 = pneg %p377
      $region70: #{vision_transformer_forward.1} parent=31 // pred_check_branch
        %690 = sbr.rel (%p688) target = $region72
      $region71: #{vision_transformer_forward.1} parent=31 // pred_region
        %p691 = scmp.lt.s32.totalorder %s35, 1
        %s692 = scalar_select %p691, %s35, 1
        %s693 = scalar_lea.vmem %s13, %s692
      $region72: #{vision_transformer_forward.1} parent=31 // pred_fallthru
        _
      // Predicated region
      $region73: #{vision_transformer_forward.1} parent=31 // pred_check
        %p694 = pneg %p403
      $region74: #{vision_transformer_forward.1} parent=31 // pred_check_branch
        %696 = sbr.rel (%p694) target = $region76
      $region75: #{vision_transformer_forward.1} parent=31 // pred_region
        %p697 = scmp.lt.s32.totalorder %s35, 1
        %s698 = scalar_select %p697, %s35, 1
        %s699 = scalar_lea.vmem %s14, %s698
      $region76: #{vision_transformer_forward.1} parent=31 // pred_fallthru
        _
      // Predicated region
      $region77: #{vision_transformer_forward.1} parent=31 // pred_check
        %p700 = pneg %p429
      $region78: #{vision_transformer_forward.1} parent=31 // pred_check_branch
        %702 = sbr.rel (%p700) target = $region80
      $region79: #{vision_transformer_forward.1} parent=31 // pred_region
        %p703 = scmp.lt.s32.totalorder %s35, 1
        %s704 = scalar_select %p703, %s35, 1
        %s705 = smul.addr %s704, 4
        %s706 = smul.addr %s705, 4
        %s707 = scalar_lea.vmem %s15, %s706
      $region80: #{vision_transformer_forward.1} parent=31 // pred_fallthru
        _
      // Predicated region
      $region81: #{vision_transformer_forward.1} parent=31 // pred_check
        %p708 = pneg %p455
      $region82: #{vision_transformer_forward.1} parent=31 // pred_check_branch
        %710 = sbr.rel (%p708) target = $region84
      $region83: #{vision_transformer_forward.1} parent=31 // pred_region
        %p711 = scmp.lt.s32.totalorder %s35, 1
        %s712 = scalar_select %p711, %s35, 1
        %s713 = scalar_lea.vmem %s16, %s712
      $region84: #{vision_transformer_forward.1} parent=31 // pred_fallthru
        _
      // Predicated region
      $region85: #{vision_transformer_forward.1} parent=31 // pred_check
        %p714 = pneg %p481
      $region86: #{vision_transformer_forward.1} parent=31 // pred_check_branch
        %716 = sbr.rel (%p714) target = $region88
      $region87: #{vision_transformer_forward.1} parent=31 // pred_region
        %p717 = scmp.lt.s32.totalorder %s35, 1
        %s718 = scalar_select %p717, %s35, 1
        %s719 = smul.addr %s718, 16
        %s720 = smul.addr %s719, 4
        %s721 = scalar_lea.vmem %s17, %s720
      $region88: #{vision_transformer_forward.1} parent=31 // pred_fallthru
        _
      // Predicated region
      $region89: #{vision_transformer_forward.1} parent=31 // pred_check
        %p722 = pneg %p507
      $region90: #{vision_transformer_forward.1} parent=31 // pred_check_branch
        %724 = sbr.rel (%p722) target = $region92
      $region91: #{vision_transformer_forward.1} parent=31 // pred_region
        %p725 = scmp.lt.s32.totalorder %s35, 1
        %s726 = scalar_select %p725, %s35, 1
        %s727 = scalar_lea.vmem %s18, %s726
      $region92: #{vision_transformer_forward.1} parent=31 // pred_fallthru
        _
      // Predicated region
      $region93: #{vision_transformer_forward.1} parent=31 // pred_check
        %p728 = pneg %p533
      $region94: #{vision_transformer_forward.1} parent=31 // pred_check_branch
        %730 = sbr.rel (%p728) target = $region96
      $region95: #{vision_transformer_forward.1} parent=31 // pred_region
        %p731 = scmp.lt.s32.totalorder %s35, 1
        %s732 = scalar_select %p731, %s35, 1
        %s733 = scalar_lea.vmem %s19, %s732
      $region96: #{vision_transformer_forward.1} parent=31 // pred_fallthru
        _
      // Predicated region
      $region97: #{vision_transformer_forward.1} parent=31 // pred_check
        %p734 = pneg %p559
      $region98: #{vision_transformer_forward.1} parent=31 // pred_check_branch
        %736 = sbr.rel (%p734) target = $region100
      $region99: #{vision_transformer_forward.1} parent=31 // pred_region
        %p737 = scmp.lt.s32.totalorder %s35, 1
        %s738 = scalar_select %p737, %s35, 1
        %s739 = scalar_lea.vmem %s20, %s738
      $region100: #{vision_transformer_forward.1} parent=31 // pred_fallthru
        _
    $region32: #{vision_transformer_forward.1} parent=5 // pred_fallthru
      _
    %p740 = scmp.le.s32.totalorder 1, %s27
    %p741 = scmp.lt.s32.totalorder %s27, 5
    %p742 = pnand %p740, %p741
    %p743 = pneg %p742
    // Predicated region
    $region101: #{vision_transformer_forward.1} parent=5 // pred_check
      _
    $region102: #{vision_transformer_forward.1} parent=5 // pred_check_branch
      %745 = sbr.rel (%p742) target = $region104
    $region103: #{vision_transformer_forward.1} parent=5 // pred_region
      %s746 = ssub.s32 %s27, 1
      %s747 = smul.u32 2, %s36
      %p748 = scmp.lt.s32.totalorder %s747, 3
      %s749 = scalar_select %p748, %s747, 3
      %s750 = smul.addr %s749, 2
      %s751 = smul.addr %s750, 4
      %s752 = scalar_lea.vmem %s0, %s751
      %p753 = pneg %p65
      %p754 = pneg %p62
      %p755 = pneg %p86
      %p756 = pneg %p83
      %p757 = pneg %p107
      %p758 = pneg %p104
      %p759 = pneg %p128
      %p760 = pneg %p125
      %p761 = pneg %p149
      %p762 = pneg %p146
      %p763 = scmp.lt.s32.totalorder %s37, 1
      %s764 = scalar_select %p763, %s37, 1
      %s765 = smul.addr %s764, 4
      %s766 = smul.addr %s765, 4
      %s767 = scalar_lea.vmem %s5, %s766
      %p768 = pneg %p175
      %p769 = pneg %p172
      %p770 = scmp.lt.s32.totalorder %s37, 1
      %s771 = scalar_select %p770, %s37, 1
      %s772 = scalar_lea.vmem %s6, %s771
      %p773 = pneg %p201
      %p774 = pneg %p198
      %p775 = scmp.lt.s32.totalorder %s37, 1
      %s776 = scalar_select %p775, %s37, 1
      %s777 = smul.addr %s776, 4
      %s778 = smul.addr %s777, 4
      %s779 = scalar_lea.vmem %s7, %s778
      %p780 = pneg %p227
      %p781 = pneg %p224
      %p782 = scmp.lt.s32.totalorder %s37, 1
      %s783 = scalar_select %p782, %s37, 1
      %s784 = scalar_lea.vmem %s8, %s783
      %p785 = pneg %p253
      %p786 = pneg %p250
      %p787 = scmp.lt.s32.totalorder %s37, 1
      %s788 = scalar_select %p787, %s37, 1
      %s789 = smul.addr %s788, 4
      %s790 = smul.addr %s789, 4
      %s791 = scalar_lea.vmem %s9, %s790
      %p792 = pneg %p279
      %p793 = pneg %p276
      %p794 = scmp.lt.s32.totalorder %s37, 1
      %s795 = scalar_select %p794, %s37, 1
      %s796 = scalar_lea.vmem %s10, %s795
      %p797 = pneg %p305
      %p798 = pneg %p302
      %p799 = scmp.lt.s32.totalorder %s37, 1
      %s800 = scalar_select %p799, %s37, 1
      %s801 = smul.addr %s800, 4
      %s802 = smul.addr %s801, 4
      %s803 = scalar_lea.vmem %s11, %s802
      %p804 = pneg %p331
      %p805 = pneg %p328
      %p806 = scmp.lt.s32.totalorder %s37, 1
      %s807 = scalar_select %p806, %s37, 1
      %s808 = scalar_lea.vmem %s12, %s807
      %p809 = pneg %p357
      %p810 = pneg %p354
      %p811 = scmp.lt.s32.totalorder %s37, 1
      %s812 = scalar_select %p811, %s37, 1
      %s813 = scalar_lea.vmem %s13, %s812
      %p814 = pneg %p383
      %p815 = pneg %p380
      %p816 = scmp.lt.s32.totalorder %s37, 1
      %s817 = scalar_select %p816, %s37, 1
      %s818 = scalar_lea.vmem %s14, %s817
      %p819 = pneg %p409
      %p820 = pneg %p406
      %p821 = scmp.lt.s32.totalorder %s37, 1
      %s822 = scalar_select %p821, %s37, 1
      %s823 = smul.addr %s822, 4
      %s824 = smul.addr %s823, 4
      %s825 = scalar_lea.vmem %s15, %s824
      %p826 = pneg %p435
      %p827 = pneg %p432
      %p828 = scmp.lt.s32.totalorder %s37, 1
      %s829 = scalar_select %p828, %s37, 1
      %s830 = scalar_lea.vmem %s16, %s829
      %p831 = pneg %p461
      %p832 = pneg %p458
      %p833 = scmp.lt.s32.totalorder %s37, 1
      %s834 = scalar_select %p833, %s37, 1
      %s835 = smul.addr %s834, 16
      %s836 = smul.addr %s835, 4
      %s837 = scalar_lea.vmem %s17, %s836
      %p838 = pneg %p487
      %p839 = pneg %p484
      %p840 = scmp.lt.s32.totalorder %s37, 1
      %s841 = scalar_select %p840, %s37, 1
      %s842 = scalar_lea.vmem %s18, %s841
      %p843 = pneg %p513
      %p844 = pneg %p510
      %p845 = scmp.lt.s32.totalorder %s37, 1
      %s846 = scalar_select %p845, %s37, 1
      %s847 = scalar_lea.vmem %s19, %s846
      %p848 = pneg %p539
      %p849 = pneg %p536
      %p850 = scmp.lt.s32.totalorder %s37, 1
      %s851 = scalar_select %p850, %s37, 1
      %s852 = scalar_lea.vmem %s20, %s851
      %p853 = pneg %p565
      %p854 = pneg %p562
      %p855 = pneg %p591
      %p856 = pneg %p588
      %s857 = smul.u32 2, %s36
      %p858 = scmp.lt.s32.totalorder %s857, 3
      %s859 = scalar_select %p858, %s857, 3
      %s860 = smul.addr %s859, 2
      %s861 = smul.addr %s860, 8
      %s862 = scalar_lea.vmem %s21, %s861
      %s863 = smul.u32 2, %s36
      %p864 = scmp.lt.s32.totalorder %s863, 3
      %s865 = scalar_select %p864, %s863, 3
      %s866 = smul.addr %s865, 2
      %s867 = smul.addr %s866, 4
      %s868 = scalar_lea.vmem %s0, %s867
      %s869 = smul.u32 2, %s36
      %p870 = scmp.lt.s32.totalorder %s37, 1
      %s871 = scalar_select %p870, %s37, 1
      %s872 = smul.addr %s871, 4
      %s873 = smul.addr %s872, 4
      %s874 = scalar_lea.vmem %s5, %s873
      %p875 = scmp.lt.s32.totalorder %s37, 1
      %s876 = scalar_select %p875, %s37, 1
      %s877 = scalar_lea.vmem %s6, %s876
      %p878 = scmp.lt.s32.totalorder %s37, 1
      %s879 = scalar_select %p878, %s37, 1
      %s880 = smul.addr %s879, 4
      %s881 = smul.addr %s880, 4
      %s882 = scalar_lea.vmem %s7, %s881
      %p883 = scmp.lt.s32.totalorder %s37, 1
      %s884 = scalar_select %p883, %s37, 1
      %s885 = scalar_lea.vmem %s8, %s884
      %p886 = scmp.lt.s32.totalorder %s37, 1
      %s887 = scalar_select %p886, %s37, 1
      %s888 = smul.addr %s887, 4
      %s889 = smul.addr %s888, 4
      %s890 = scalar_lea.vmem %s9, %s889
      %p891 = scmp.lt.s32.totalorder %s37, 1
      %s892 = scalar_select %p891, %s37, 1
      %s893 = scalar_lea.vmem %s10, %s892
      %p894 = scmp.lt.s32.totalorder %s37, 1
      %s895 = scalar_select %p894, %s37, 1
      %s896 = smul.addr %s895, 4
      %s897 = smul.addr %s896, 4
      %s898 = scalar_lea.vmem %s11, %s897
      %p899 = scmp.lt.s32.totalorder %s37, 1
      %s900 = scalar_select %p899, %s37, 1
      %s901 = scalar_lea.vmem %s12, %s900
      %p902 = scmp.lt.s32.totalorder %s37, 1
      %s903 = scalar_select %p902, %s37, 1
      %s904 = scalar_lea.vmem %s13, %s903
      %p905 = scmp.lt.s32.totalorder %s37, 1
      %s906 = scalar_select %p905, %s37, 1
      %s907 = scalar_lea.vmem %s14, %s906
      %p908 = scmp.lt.s32.totalorder %s37, 1
      %s909 = scalar_select %p908, %s37, 1
      %s910 = smul.addr %s909, 4
      %s911 = smul.addr %s910, 4
      %s912 = scalar_lea.vmem %s15, %s911
      %p913 = scmp.lt.s32.totalorder %s37, 1
      %s914 = scalar_select %p913, %s37, 1
      %s915 = scalar_lea.vmem %s16, %s914
      %p916 = scmp.lt.s32.totalorder %s37, 1
      %s917 = scalar_select %p916, %s37, 1
      %s918 = smul.addr %s917, 16
      %s919 = smul.addr %s918, 4
      %s920 = scalar_lea.vmem %s17, %s919
      %p921 = scmp.lt.s32.totalorder %s37, 1
      %s922 = scalar_select %p921, %s37, 1
      %s923 = scalar_lea.vmem %s18, %s922
      %p924 = scmp.lt.s32.totalorder %s37, 1
      %s925 = scalar_select %p924, %s37, 1
      %s926 = scalar_lea.vmem %s19, %s925
      %p927 = scmp.lt.s32.totalorder %s37, 1
      %s928 = scalar_select %p927, %s37, 1
      %s929 = scalar_lea.vmem %s20, %s928
      %s930 = smul.u32 2, %s36
      %p931 = scmp.lt.s32.totalorder %s930, 3
      %s932 = scalar_select %p931, %s930, 3
      %s933 = smul.addr %s932, 2
      %s934 = smul.addr %s933, 8
      %s935 = scalar_lea.vmem %s21, %s934
      %s936 = smul.u32 2, %s36
      %p938 = scmp.eq.s32.totalorder %s37, 0
      // Predicated region
      $region105: #{vision_transformer_forward.1} parent=103 // pred_check
        %p939 = pneg %p938
      $region106: #{vision_transformer_forward.1} parent=103 // pred_check_branch
        %941 = sbr.rel (%p939) target = $region108
      $region107: #{vision_transformer_forward.1} parent=103 // pred_region
        %v942 = vld [vmem:[%s868] sm:$0xf]
        %v943 = vld [vmem:[%s868 + $0x4] sm:$0xf]
        %v944 = vld [vmem:[%s868 + $0x8] sm:$0xf]
        %v945 = vld [vmem:[%s868 + $0xc] sm:$0xf]
        %v946 = vld [vmem:[%s2] sm:$0xf]
        %v947 = vld [vmem:[%s2 + $0x4] sm:$0xf]
        %v948 = vld [vmem:[%s2 + $0x8] sm:$0xf]
        %v949 = vld [vmem:[%s2 + $0xc] sm:$0xf]
        %v950 = vld [vmem:[%s2 + $0x10] sm:$0xf]
        %v951 = vld [vmem:[%s2 + $0x14] sm:$0xf]
        %v952 = vld [vmem:[%s2 + $0x18] sm:$0xf]
        %v953 = vld [vmem:[%s2 + $0x1c] sm:$0xf]
        %v954 = vld [vmem:[%s2 + $0x20] sm:$0xf]
        %v955 = vld [vmem:[%s2 + $0x24] sm:$0xf]
        %v956 = vld [vmem:[%s2 + $0x28] sm:$0xf]
        %v957 = vld [vmem:[%s2 + $0x2c] sm:$0xf]
        %v958 = vld [vmem:[%s2 + $0x30] sm:$0xf]
        %v959 = vld [vmem:[%s2 + $0x34] sm:$0xf]
        %v960 = vld [vmem:[%s2 + $0x38] sm:$0xf]
        %v961 = vld [vmem:[%s2 + $0x3c] sm:$0xf]
        %v966 = vunpack.c.l.b16 %v942
        %v967 = vunpack.c.l.b16 %v943
        %v968 = vunpack.c.l.b16 %v944
        %v969 = vunpack.c.l.b16 %v945
        %v970 = vpack.c.b16 %v967, %v966
        %v971 = vpack.c.b16 %v969, %v968
        %v990 = vunpack.c.l.b16 %v946
        %v991 = vunpack.c.l.b16 %v947
        %v992 = vunpack.c.l.b16 %v948
        %v993 = vunpack.c.l.b16 %v949
        %v994 = vunpack.c.l.b16 %v950
        %v995 = vunpack.c.l.b16 %v951
        %v996 = vunpack.c.l.b16 %v952
        %v997 = vunpack.c.l.b16 %v953
        %v998 = vunpack.c.l.b16 %v954
        %v999 = vunpack.c.l.b16 %v955
        %v1000 = vunpack.c.l.b16 %v956
        %v1001 = vunpack.c.l.b16 %v957
        %v1002 = vunpack.c.l.b16 %v958
        %v1003 = vunpack.c.l.b16 %v959
        %v1004 = vunpack.c.l.b16 %v960
        %v1005 = vunpack.c.l.b16 %v961
        %v1006 = vpack.c.b16 %v991, %v990
        %v1007 = vpack.c.b16 %v993, %v992
        %v1008 = vpack.c.b16 %v995, %v994
        %v1009 = vpack.c.b16 %v997, %v996
        %v1010 = vpack.c.b16 %v999, %v998
        %v1011 = vpack.c.b16 %v1001, %v1000
        %v1012 = vpack.c.b16 %v1003, %v1002
        %v1013 = vpack.c.b16 %v1005, %v1004
        %1022 = vmatprep.subr.bf16.mxu0 0
        %1023 = vmatpush1.bf16.msra.mxu0 %v1013
        %1024 = vmatprep.subr.bf16.mxu0 0
        %1025 = vmatpush1.bf16.msra.mxu0 %v1012
        %1026 = vmatprep.subr.bf16.mxu0 0
        %1027 = vmatpush1.bf16.msra.mxu0 %v1011
        %1028 = vmatprep.subr.bf16.mxu0 0
        %1029 = vmatpush1.bf16.msra.mxu0 %v1010
        %1030 = vmatprep.subr.bf16.mxu0 0
        %1031 = vmatpush1.bf16.msra.mxu0 %v1009
        %1032 = vmatprep.subr.bf16.mxu0 0
        %1033 = vmatpush1.bf16.msra.mxu0 %v1008
        %1034 = vmatprep.subr.bf16.mxu0 0
        %1035 = vmatpush1.bf16.msra.mxu0 %v1007
        %1036 = vmatprep.subr.bf16.mxu0 0
        %1037 = vmatpush1.bf16.msra.mxu0 %v1006
        %1038 = vmatprep.subr.bf16.mxu0 0
        %1039 = vmatpush2.bf16.msra.mxu0 0
        %1040 = vmatprep.subr.bf16.mxu0 0
        %1041 = vmatpush2.bf16.msra.mxu0 0
        %1042 = vmatprep.subr.bf16.mxu0 0
        %1043 = vmatpush2.bf16.msra.mxu0 0
        %1044 = vmatprep.subr.bf16.mxu0 0
        %1045 = vmatpush2.bf16.msra.mxu0 0
        %1046 = vmatprep.subr.bf16.mxu0 0
        %1047 = vmatpush2.bf16.msra.mxu0 0
        %1048 = vmatprep.subr.bf16.mxu0 0
        %1049 = vmatpush2.bf16.msra.mxu0 0
        %1050 = vmatprep.subr.bf16.mxu0 0
        %1051 = vmatpush2.bf16.msra.mxu0 0
        %1052 = vmatprep.subr.bf16.mxu0 0
        %1053 = vmatpush2.bf16.msra.mxu0 0
        %1054 = vmatprep.mubr.bf16.mxu0 0
        %1055 = vmatmul.mubr.bf16.gmra.mxu0 %v970
        %v1056 = vpop.f32.mrf.mxu0
        %v1057 = vadd.f32 0.0, %v1056
        %v1058 = vpop.f32.mrf.mxu0
        %v1059 = vpop.f32.mrf.mxu0
        %v1060 = vadd.f32 0.0, %v1059
        %v1061 = vpop.f32.mrf.mxu0
        %1062 = vmatprep.mubr.bf16.mxu0 0
        %1063 = vmatmul.mubr.bf16.gmra.mxu0 %v971
        %v1064 = vpop.f32.mrf.mxu0
        %v1065 = vadd.f32 0.0, %v1064
        %v1066 = vpop.f32.mrf.mxu0
        %v1067 = vpop.f32.mrf.mxu0
        %v1068 = vadd.f32 0.0, %v1067
        %v1069 = vpop.f32.mrf.mxu0
        %1070 = vdwg.mxu0
        %v1071 = vld [vmem:[%s1] sm:$0xff]
        %v1072 = vld [vmem:[%s1 + $0x8] sm:$0xff]
        %v1073 = vadd.f32 %v1057, %v1071
        %v1074 = vadd.f32 %v1060, %v1072
        %v1075 = vadd.f32 %v1065, %v1071
        %v1076 = vadd.f32 %v1068, %v1072
        %vm1077 = vcmask 261120
        %1078 = vst.msk [vmem:[#allocation2] sm:$0xff] %vm1077, %v1073
        %1079 = vst.msk [vmem:[#allocation2 + $0x8] sm:$0xff] %vm1077, %v1074
        %1080 = vst.msk [vmem:[#allocation2 + $0x10] sm:$0xff] %vm1077, %v1075
        %1081 = vst.msk [vmem:[#allocation2 + $0x18] sm:$0xff] %vm1077, %v1076
      $region108: #{vision_transformer_forward.1} parent=103 // pred_fallthru
        _
      %v1082 = vld [vmem:[#allocation2] sm:$0xff]
      %v1083 = vld [vmem:[#allocation2 + $0x8] sm:$0xff]
      %v1084 = vld [vmem:[#allocation2 + $0x10] sm:$0xff]
      %v1085 = vld [vmem:[#allocation2 + $0x18] sm:$0xff]
      %v1086 = vpack.c.bf16 %v1083, %v1082
      %v1087 = vpack.c.bf16 %v1085, %v1084
      %v1088 = vld [vmem:[%s874] sm:$0xf]
      %v1089 = vld [vmem:[%s874 + $0x4] sm:$0xf]
      %v1090 = vld [vmem:[%s874 + $0x8] sm:$0xf]
      %v1091 = vld [vmem:[%s874 + $0xc] sm:$0xf]
      %v1092 = vld [vmem:[%s877] sm:$0x1]
      %v1094 = vlaneseq
      %v1095 = vshrl.u32 %v1094, 7
      %v1096 = vsub.s32 0, %v1095
      %v1097 = vrot.slane %v1092, %v1096
      %v1103 = vunpack.c.l.b16 %v1088
      %v1104 = vunpack.c.l.b16 %v1089
      %v1105 = vunpack.c.l.b16 %v1090
      %v1106 = vunpack.c.l.b16 %v1091
      %v1107 = vpack.c.b16 %v1104, %v1103
      %v1108 = vpack.c.b16 %v1106, %v1105
      %vm1111 = vcmask 261120
      %v1113 = vsel %vm1111, %v1086, 0
      %v1116 = vsel %vm1111, %v1087, 0
      %1118 = vmatprep.subr.bf16.mxu0 0
      %1119 = vmatpush1.bf16.msra.mxu0 0
      %1120 = vmatprep.subr.bf16.mxu0 0
      %1121 = vmatpush1.bf16.msra.mxu0 0
      %1122 = vmatprep.subr.bf16.mxu0 0
      %1123 = vmatpush1.bf16.msra.mxu0 0
      %1124 = vmatprep.subr.bf16.mxu0 0
      %1125 = vmatpush1.bf16.msra.mxu0 0
      %1126 = vmatprep.subr.bf16.mxu0 0
      %1127 = vmatpush1.bf16.msra.mxu0 0
      %1128 = vmatprep.subr.bf16.mxu0 0
      %1129 = vmatpush1.bf16.msra.mxu0 0
      %1130 = vmatprep.subr.bf16.mxu0 0
      %1131 = vmatpush1.bf16.msra.mxu0 %v1108
      %1132 = vmatprep.subr.bf16.mxu0 0
      %1133 = vmatpush1.bf16.msra.mxu0 %v1107
      %1134 = vmatprep.subr.bf16.mxu0 0
      %1135 = vmatpush2.bf16.msra.mxu0 0
      %1136 = vmatprep.subr.bf16.mxu0 0
      %1137 = vmatpush2.bf16.msra.mxu0 0
      %1138 = vmatprep.subr.bf16.mxu0 0
      %1139 = vmatpush2.bf16.msra.mxu0 0
      %1140 = vmatprep.subr.bf16.mxu0 0
      %1141 = vmatpush2.bf16.msra.mxu0 0
      %1142 = vmatprep.subr.bf16.mxu0 0
      %1143 = vmatpush2.bf16.msra.mxu0 0
      %1144 = vmatprep.subr.bf16.mxu0 0
      %1145 = vmatpush2.bf16.msra.mxu0 0
      %1146 = vmatprep.subr.bf16.mxu0 0
      %1147 = vmatpush2.bf16.msra.mxu0 0
      %1148 = vmatprep.subr.bf16.mxu0 0
      %1149 = vmatpush2.bf16.msra.mxu0 0
      %1150 = vmatprep.mubr.bf16.mxu0 0
      %1151 = vmatmul.mubr.bf16.gmra.mxu0 %v1113
      %v1152 = vpop.f32.mrf.mxu0
      %v1153 = vadd.f32 %v1097, %v1152
      %v1154 = vpop.f32.mrf.mxu0
      %v1155 = vpop.f32.mrf.mxu0
      %v1156 = vadd.f32 %v1097, %v1155
      %v1157 = vpop.f32.mrf.mxu0
      %1158 = vmatprep.mubr.bf16.mxu0 0
      %1159 = vmatmul.mubr.bf16.gmra.mxu0 %v1116
      %v1160 = vpop.f32.mrf.mxu0
      %v1161 = vadd.f32 %v1097, %v1160
      %v1162 = vpop.f32.mrf.mxu0
      %v1163 = vpop.f32.mrf.mxu0
      %v1164 = vadd.f32 %v1097, %v1163
      %v1165 = vpop.f32.mrf.mxu0
      %1166 = vdwg.mxu0
      %v1167 = vld [vmem:[%s882] sm:$0xf]
      %v1168 = vld [vmem:[%s882 + $0x4] sm:$0xf]
      %v1169 = vld [vmem:[%s882 + $0x8] sm:$0xf]
      %v1170 = vld [vmem:[%s882 + $0xc] sm:$0xf]
      %v1171 = vld [vmem:[%s885] sm:$0x1]
      %v1173 = vlaneseq
      %v1174 = vshrl.u32 %v1173, 7
      %v1175 = vsub.s32 0, %v1174
      %v1176 = vrot.slane %v1171, %v1175
      %v1182 = vunpack.c.l.b16 %v1167
      %v1183 = vunpack.c.l.b16 %v1168
      %v1184 = vunpack.c.l.b16 %v1169
      %v1185 = vunpack.c.l.b16 %v1170
      %v1186 = vpack.c.b16 %v1183, %v1182
      %v1187 = vpack.c.b16 %v1185, %v1184
      %1190 = vmatprep.subr.bf16.mxu0 0
      %1191 = vmatpush1.bf16.msra.mxu0 0
      %1192 = vmatprep.subr.bf16.mxu0 0
      %1193 = vmatpush1.bf16.msra.mxu0 0
      %1194 = vmatprep.subr.bf16.mxu0 0
      %1195 = vmatpush1.bf16.msra.mxu0 0
      %1196 = vmatprep.subr.bf16.mxu0 0
      %1197 = vmatpush1.bf16.msra.mxu0 0
      %1198 = vmatprep.subr.bf16.mxu0 0
      %1199 = vmatpush1.bf16.msra.mxu0 0
      %1200 = vmatprep.subr.bf16.mxu0 0
      %1201 = vmatpush1.bf16.msra.mxu0 0
      %1202 = vmatprep.subr.bf16.mxu0 0
      %1203 = vmatpush1.bf16.msra.mxu0 %v1187
      %1204 = vmatprep.subr.bf16.mxu0 0
      %1205 = vmatpush1.bf16.msra.mxu0 %v1186
      %1206 = vmatprep.subr.bf16.mxu0 0
      %1207 = vmatpush2.bf16.msra.mxu0 0
      %1208 = vmatprep.subr.bf16.mxu0 0
      %1209 = vmatpush2.bf16.msra.mxu0 0
      %1210 = vmatprep.subr.bf16.mxu0 0
      %1211 = vmatpush2.bf16.msra.mxu0 0
      %1212 = vmatprep.subr.bf16.mxu0 0
      %1213 = vmatpush2.bf16.msra.mxu0 0
      %1214 = vmatprep.subr.bf16.mxu0 0
      %1215 = vmatpush2.bf16.msra.mxu0 0
      %1216 = vmatprep.subr.bf16.mxu0 0
      %1217 = vmatpush2.bf16.msra.mxu0 0
      %1218 = vmatprep.subr.bf16.mxu0 0
      %1219 = vmatpush2.bf16.msra.mxu0 0
      %1220 = vmatprep.subr.bf16.mxu0 0
      %1221 = vmatpush2.bf16.msra.mxu0 0
      %1222 = vmatprep.mubr.bf16.mxu0 0
      %1223 = vmatmul.mubr.bf16.gmra.mxu0 %v1113
      %v1224 = vpop.f32.mrf.mxu0
      %v1225 = vadd.f32 %v1176, %v1224
      %v1226 = vpop.f32.mrf.mxu0
      %v1227 = vpop.f32.mrf.mxu0
      %v1228 = vadd.f32 %v1176, %v1227
      %v1229 = vpop.f32.mrf.mxu0
      %1230 = vmatprep.mubr.bf16.mxu0 0
      %1231 = vmatmul.mubr.bf16.gmra.mxu0 %v1116
      %v1232 = vpop.f32.mrf.mxu0
      %v1233 = vadd.f32 %v1176, %v1232
      %v1234 = vpop.f32.mrf.mxu0
      %v1235 = vpop.f32.mrf.mxu0
      %v1236 = vadd.f32 %v1176, %v1235
      %v1237 = vpop.f32.mrf.mxu0
      %1238 = vdwg.mxu0
      %v1239 = vld [vmem:[%s890] sm:$0xf]
      %v1240 = vld [vmem:[%s890 + $0x4] sm:$0xf]
      %v1241 = vld [vmem:[%s890 + $0x8] sm:$0xf]
      %v1242 = vld [vmem:[%s890 + $0xc] sm:$0xf]
      %v1243 = vld [vmem:[%s893] sm:$0x1]
      %v1245 = vlaneseq
      %v1246 = vshrl.u32 %v1245, 7
      %v1247 = vsub.s32 0, %v1246
      %v1248 = vrot.slane %v1243, %v1247
      %v1254 = vunpack.c.l.b16 %v1239
      %v1255 = vunpack.c.l.b16 %v1240
      %v1256 = vunpack.c.l.b16 %v1241
      %v1257 = vunpack.c.l.b16 %v1242
      %v1258 = vpack.c.b16 %v1255, %v1254
      %v1259 = vpack.c.b16 %v1257, %v1256
      %1262 = vmatprep.subr.bf16.mxu0 0
      %1263 = vmatpush1.bf16.msra.mxu0 0
      %1264 = vmatprep.subr.bf16.mxu0 0
      %1265 = vmatpush1.bf16.msra.mxu0 0
      %1266 = vmatprep.subr.bf16.mxu0 0
      %1267 = vmatpush1.bf16.msra.mxu0 0
      %1268 = vmatprep.subr.bf16.mxu0 0
      %1269 = vmatpush1.bf16.msra.mxu0 0
      %1270 = vmatprep.subr.bf16.mxu0 0
      %1271 = vmatpush1.bf16.msra.mxu0 0
      %1272 = vmatprep.subr.bf16.mxu0 0
      %1273 = vmatpush1.bf16.msra.mxu0 0
      %1274 = vmatprep.subr.bf16.mxu0 0
      %1275 = vmatpush1.bf16.msra.mxu0 %v1259
      %1276 = vmatprep.subr.bf16.mxu0 0
      %1277 = vmatpush1.bf16.msra.mxu0 %v1258
      %1278 = vmatprep.subr.bf16.mxu0 0
      %1279 = vmatpush2.bf16.msra.mxu0 0
      %1280 = vmatprep.subr.bf16.mxu0 0
      %1281 = vmatpush2.bf16.msra.mxu0 0
      %1282 = vmatprep.subr.bf16.mxu0 0
      %1283 = vmatpush2.bf16.msra.mxu0 0
      %1284 = vmatprep.subr.bf16.mxu0 0
      %1285 = vmatpush2.bf16.msra.mxu0 0
      %1286 = vmatprep.subr.bf16.mxu0 0
      %1287 = vmatpush2.bf16.msra.mxu0 0
      %1288 = vmatprep.subr.bf16.mxu0 0
      %1289 = vmatpush2.bf16.msra.mxu0 0
      %1290 = vmatprep.subr.bf16.mxu0 0
      %1291 = vmatpush2.bf16.msra.mxu0 0
      %1292 = vmatprep.subr.bf16.mxu0 0
      %1293 = vmatpush2.bf16.msra.mxu0 0
      %1294 = vmatprep.mubr.bf16.mxu0 0
      %1295 = vmatmul.mubr.bf16.gmra.mxu0 %v1113
      %v1296 = vpop.f32.mrf.mxu0
      %v1297 = vadd.f32 %v1248, %v1296
      %v1298 = vpop.f32.mrf.mxu0
      %v1299 = vpop.f32.mrf.mxu0
      %v1300 = vadd.f32 %v1248, %v1299
      %v1301 = vpop.f32.mrf.mxu0
      %1302 = vmatprep.mubr.bf16.mxu0 0
      %1303 = vmatmul.mubr.bf16.gmra.mxu0 %v1116
      %v1304 = vpop.f32.mrf.mxu0
      %v1305 = vadd.f32 %v1248, %v1304
      %v1306 = vpop.f32.mrf.mxu0
      %v1307 = vpop.f32.mrf.mxu0
      %v1308 = vadd.f32 %v1248, %v1307
      %v1309 = vpop.f32.mrf.mxu0
      %1310 = vdwg.mxu0
      %v1311 = vpack.c.bf16 %v1156, %v1153
      %v1312 = vpack.c.bf16 %v1164, %v1161
      %v1313 = vpack.c.bf16 %v1228, %v1225
      %v1314 = vpack.c.bf16 %v1236, %v1233
      %v1316 = vsel %vm1111, %v1311, 0
      %v1319 = vsel %vm1111, %v1313, 0
      %1321 = vmatprep.subr.bf16.mxu0 0
      %1322 = vmatpush1.bf16.xpose.msra.mxu0 0
      %1323 = vmatprep.subr.bf16.mxu0 0
      %1324 = vmatpush1.bf16.xpose.msra.mxu0 0
      %1325 = vmatprep.subr.bf16.mxu0 0
      %1326 = vmatpush1.bf16.xpose.msra.mxu0 0
      %1327 = vmatprep.subr.bf16.mxu0 0
      %1328 = vmatpush1.bf16.xpose.msra.mxu0 0
      %1329 = vmatprep.subr.bf16.mxu0 0
      %1330 = vmatpush1.bf16.xpose.msra.mxu0 0
      %1331 = vmatprep.subr.bf16.mxu0 0
      %1332 = vmatpush1.bf16.xpose.msra.mxu0 0
      %1333 = vmatprep.subr.bf16.mxu0 0
      %1334 = vmatpush1.bf16.xpose.msra.mxu0 0
      %1335 = vmatprep.subr.bf16.mxu0 0
      %1336 = vmatpush1.bf16.xpose.msra.mxu0 %v1319
      %1337 = vmatprep.subr.bf16.mxu0 0
      %1338 = vmatpush2.bf16.xpose.msra.mxu0 0
      %1339 = vmatprep.subr.bf16.mxu0 0
      %1340 = vmatpush2.bf16.xpose.msra.mxu0 0
      %1341 = vmatprep.subr.bf16.mxu0 0
      %1342 = vmatpush2.bf16.xpose.msra.mxu0 0
      %1343 = vmatprep.subr.bf16.mxu0 0
      %1344 = vmatpush2.bf16.xpose.msra.mxu0 0
      %1345 = vmatprep.subr.bf16.mxu0 0
      %1346 = vmatpush2.bf16.xpose.msra.mxu0 0
      %1347 = vmatprep.subr.bf16.mxu0 0
      %1348 = vmatpush2.bf16.xpose.msra.mxu0 0
      %1349 = vmatprep.subr.bf16.mxu0 0
      %1350 = vmatpush2.bf16.xpose.msra.mxu0 0
      %1351 = vmatprep.subr.bf16.mxu0 0
      %1352 = vmatpush2.bf16.xpose.msra.mxu0 0
      %1353 = vmatprep.mubr.bf16.mxu0 0
      %1354 = vmatmul.mubr.bf16.gmra.mxu0 %v1316
      %v1355 = vpop.f32.mrf.mxu0
      %v1356 = vadd.f32 0.0, %v1355
      %v1357 = vpop.f32.mrf.mxu0
      %v1358 = vpop.f32.mrf.mxu0
      %v1359 = vadd.f32 0.0, %v1358
      %v1360 = vpop.f32.mrf.mxu0
      %1361 = vdwg.mxu0
      %v1363 = vsel %vm1111, %v1312, 0
      %v1366 = vsel %vm1111, %v1314, 0
      %1368 = vmatprep.subr.bf16.mxu0 0
      %1369 = vmatpush1.bf16.xpose.msra.mxu0 0
      %1370 = vmatprep.subr.bf16.mxu0 0
      %1371 = vmatpush1.bf16.xpose.msra.mxu0 0
      %1372 = vmatprep.subr.bf16.mxu0 0
      %1373 = vmatpush1.bf16.xpose.msra.mxu0 0
      %1374 = vmatprep.subr.bf16.mxu0 0
      %1375 = vmatpush1.bf16.xpose.msra.mxu0 0
      %1376 = vmatprep.subr.bf16.mxu0 0
      %1377 = vmatpush1.bf16.xpose.msra.mxu0 0
      %1378 = vmatprep.subr.bf16.mxu0 0
      %1379 = vmatpush1.bf16.xpose.msra.mxu0 0
      %1380 = vmatprep.subr.bf16.mxu0 0
      %1381 = vmatpush1.bf16.xpose.msra.mxu0 0
      %1382 = vmatprep.subr.bf16.mxu0 0
      %1383 = vmatpush1.bf16.xpose.msra.mxu0 %v1366
      %1384 = vmatprep.subr.bf16.mxu0 0
      %1385 = vmatpush2.bf16.xpose.msra.mxu0 0
      %1386 = vmatprep.subr.bf16.mxu0 0
      %1387 = vmatpush2.bf16.xpose.msra.mxu0 0
      %1388 = vmatprep.subr.bf16.mxu0 0
      %1389 = vmatpush2.bf16.xpose.msra.mxu0 0
      %1390 = vmatprep.subr.bf16.mxu0 0
      %1391 = vmatpush2.bf16.xpose.msra.mxu0 0
      %1392 = vmatprep.subr.bf16.mxu0 0
      %1393 = vmatpush2.bf16.xpose.msra.mxu0 0
      %1394 = vmatprep.subr.bf16.mxu0 0
      %1395 = vmatpush2.bf16.xpose.msra.mxu0 0
      %1396 = vmatprep.subr.bf16.mxu0 0
      %1397 = vmatpush2.bf16.xpose.msra.mxu0 0
      %1398 = vmatprep.subr.bf16.mxu0 0
      %1399 = vmatpush2.bf16.xpose.msra.mxu0 0
      %1400 = vmatprep.mubr.bf16.mxu0 0
      %1401 = vmatmul.mubr.bf16.gmra.mxu0 %v1363
      %v1402 = vpop.f32.mrf.mxu0
      %v1403 = vadd.f32 0.0, %v1402
      %v1404 = vpop.f32.mrf.mxu0
      %v1405 = vpop.f32.mrf.mxu0
      %v1406 = vadd.f32 0.0, %v1405
      %v1407 = vpop.f32.mrf.mxu0
      %1408 = vdwg.mxu0
      %vm1409 = vcmask 130048
      %v1410 = vsel %vm1409, %v1356, -inf
      %1411 = vmax.xlane.f32.xlu0 %v1410
      %v1412 = vpop.xlane.xlu0 %1411
      %v1413 = vsel %vm1409, %v1359, -inf
      %1414 = vmax.xlane.f32.xlu0 %v1413
      %v1415 = vpop.xlane.xlu0 %1414
      %v1416 = vsel %vm1409, %v1403, -inf
      %1417 = vmax.xlane.f32.xlu0 %v1416
      %v1418 = vpop.xlane.xlu0 %1417
      %v1419 = vsel %vm1409, %v1406, -inf
      %1420 = vmax.xlane.f32.xlu0 %v1419
      %v1421 = vpop.xlane.xlu0 %1420
      %v1422 = vsub.f32 %v1356, %v1412
      %v1423 = vsub.f32 %v1359, %v1415
      %v1424 = vsub.f32 %v1403, %v1418
      %v1425 = vsub.f32 %v1406, %v1421
      %v1426 = vmul.f32 %v1422, 1.442695
      %v1427 = vpow.pop %v1426
      %v1428 = vmul.f32 %v1423, 1.442695
      %v1429 = vpow.pop %v1428
      %v1430 = vmul.f32 %v1424, 1.442695
      %v1431 = vpow.pop %v1430
      %v1432 = vmul.f32 %v1425, 1.442695
      %v1433 = vpow.pop %v1432
      %v1434 = vsel %vm1409, %v1427, 0.0
      %1435 = vadd.xlane.f32.xlu0 %v1434
      %v1436 = vpop.xlane.xlu0 %1435
      %v1437 = vsel %vm1409, %v1429, 0.0
      %1438 = vadd.xlane.f32.xlu0 %v1437
      %v1439 = vpop.xlane.xlu0 %1438
      %v1440 = vsel %vm1409, %v1431, 0.0
      %1441 = vadd.xlane.f32.xlu0 %v1440
      %v1442 = vpop.xlane.xlu0 %1441
      %v1443 = vsel %vm1409, %v1433, 0.0
      %1444 = vadd.xlane.f32.xlu0 %v1443
      %v1445 = vpop.xlane.xlu0 %1444
      %v1446 = vrcp.pop %v1436
      %v1447 = vrcp.pop %v1439
      %v1448 = vrcp.pop %v1442
      %v1449 = vrcp.pop %v1445
      %v1450 = vmul.f32 %v1427, %v1446
      %v1451 = vmul.f32 %v1429, %v1447
      %v1452 = vmul.f32 %v1431, %v1448
      %v1453 = vmul.f32 %v1433, %v1449
      %v1454 = vpack.c.bf16 %v1451, %v1450
      %v1455 = vpack.c.bf16 %v1453, %v1452
      %v1456 = vpack.c.bf16 %v1300, %v1297
      %v1457 = vpack.c.bf16 %v1308, %v1305
      %v1459 = vsel %vm1409, %v1454, 0
      %1461 = vmatprep.subr.bf16.mxu0 0
      %1462 = vmatpush1.bf16.msra.mxu0 0
      %1463 = vmatprep.subr.bf16.mxu0 0
      %1464 = vmatpush1.bf16.msra.mxu0 0
      %1465 = vmatprep.subr.bf16.mxu0 0
      %1466 = vmatpush1.bf16.msra.mxu0 0
      %1467 = vmatprep.subr.bf16.mxu0 0
      %1468 = vmatpush1.bf16.msra.mxu0 0
      %1469 = vmatprep.subr.bf16.mxu0 0
      %1470 = vmatpush1.bf16.msra.mxu0 0
      %1471 = vmatprep.subr.bf16.mxu0 0
      %1472 = vmatpush1.bf16.msra.mxu0 0
      %1473 = vmatprep.subr.bf16.mxu0 0
      %1474 = vmatpush1.bf16.msra.mxu0 0
      %1475 = vmatprep.subr.bf16.mxu0 0
      %1476 = vmatpush1.bf16.msra.mxu0 %v1456
      %1477 = vmatprep.subr.bf16.mxu0 0
      %1478 = vmatpush2.bf16.msra.mxu0 0
      %1479 = vmatprep.subr.bf16.mxu0 0
      %1480 = vmatpush2.bf16.msra.mxu0 0
      %1481 = vmatprep.subr.bf16.mxu0 0
      %1482 = vmatpush2.bf16.msra.mxu0 0
      %1483 = vmatprep.subr.bf16.mxu0 0
      %1484 = vmatpush2.bf16.msra.mxu0 0
      %1485 = vmatprep.subr.bf16.mxu0 0
      %1486 = vmatpush2.bf16.msra.mxu0 0
      %1487 = vmatprep.subr.bf16.mxu0 0
      %1488 = vmatpush2.bf16.msra.mxu0 0
      %1489 = vmatprep.subr.bf16.mxu0 0
      %1490 = vmatpush2.bf16.msra.mxu0 0
      %1491 = vmatprep.subr.bf16.mxu0 0
      %1492 = vmatpush2.bf16.msra.mxu0 0
      %1493 = vmatprep.mubr.bf16.mxu0 0
      %1494 = vmatmul.mubr.bf16.gmra.mxu0 %v1459
      %v1495 = vpop.f32.mrf.mxu0
      %v1496 = vadd.f32 0.0, %v1495
      %v1497 = vpop.f32.mrf.mxu0
      %v1498 = vpop.f32.mrf.mxu0
      %v1499 = vadd.f32 0.0, %v1498
      %v1500 = vpop.f32.mrf.mxu0
      %1501 = vdwg.mxu0
      %v1503 = vsel %vm1409, %v1455, 0
      %1505 = vmatprep.subr.bf16.mxu0 0
      %1506 = vmatpush1.bf16.msra.mxu0 0
      %1507 = vmatprep.subr.bf16.mxu0 0
      %1508 = vmatpush1.bf16.msra.mxu0 0
      %1509 = vmatprep.subr.bf16.mxu0 0
      %1510 = vmatpush1.bf16.msra.mxu0 0
      %1511 = vmatprep.subr.bf16.mxu0 0
      %1512 = vmatpush1.bf16.msra.mxu0 0
      %1513 = vmatprep.subr.bf16.mxu0 0
      %1514 = vmatpush1.bf16.msra.mxu0 0
      %1515 = vmatprep.subr.bf16.mxu0 0
      %1516 = vmatpush1.bf16.msra.mxu0 0
      %1517 = vmatprep.subr.bf16.mxu0 0
      %1518 = vmatpush1.bf16.msra.mxu0 0
      %1519 = vmatprep.subr.bf16.mxu0 0
      %1520 = vmatpush1.bf16.msra.mxu0 %v1457
      %1521 = vmatprep.subr.bf16.mxu0 0
      %1522 = vmatpush2.bf16.msra.mxu0 0
      %1523 = vmatprep.subr.bf16.mxu0 0
      %1524 = vmatpush2.bf16.msra.mxu0 0
      %1525 = vmatprep.subr.bf16.mxu0 0
      %1526 = vmatpush2.bf16.msra.mxu0 0
      %1527 = vmatprep.subr.bf16.mxu0 0
      %1528 = vmatpush2.bf16.msra.mxu0 0
      %1529 = vmatprep.subr.bf16.mxu0 0
      %1530 = vmatpush2.bf16.msra.mxu0 0
      %1531 = vmatprep.subr.bf16.mxu0 0
      %1532 = vmatpush2.bf16.msra.mxu0 0
      %1533 = vmatprep.subr.bf16.mxu0 0
      %1534 = vmatpush2.bf16.msra.mxu0 0
      %1535 = vmatprep.subr.bf16.mxu0 0
      %1536 = vmatpush2.bf16.msra.mxu0 0
      %1537 = vmatprep.mubr.bf16.mxu0 0
      %1538 = vmatmul.mubr.bf16.gmra.mxu0 %v1503
      %v1539 = vpop.f32.mrf.mxu0
      %v1540 = vadd.f32 0.0, %v1539
      %v1541 = vpop.f32.mrf.mxu0
      %v1542 = vpop.f32.mrf.mxu0
      %v1543 = vadd.f32 0.0, %v1542
      %v1544 = vpop.f32.mrf.mxu0
      %1545 = vdwg.mxu0
      %v1546 = vpack.c.bf16 %v1499, %v1496
      %v1547 = vpack.c.bf16 %v1543, %v1540
      %v1548 = vld [vmem:[%s898] sm:$0xf]
      %v1549 = vld [vmem:[%s898 + $0x4] sm:$0xf]
      %v1550 = vld [vmem:[%s898 + $0x8] sm:$0xf]
      %v1551 = vld [vmem:[%s898 + $0xc] sm:$0xf]
      %v1552 = vld [vmem:[%s901] sm:$0x1]
      %v1554 = vlaneseq
      %v1555 = vshrl.u32 %v1554, 7
      %v1556 = vsub.s32 0, %v1555
      %v1557 = vrot.slane %v1552, %v1556
      %v1563 = vunpack.c.l.b16 %v1548
      %v1564 = vunpack.c.l.b16 %v1549
      %v1565 = vunpack.c.l.b16 %v1550
      %v1566 = vunpack.c.l.b16 %v1551
      %v1567 = vpack.c.b16 %v1564, %v1563
      %v1568 = vpack.c.b16 %v1566, %v1565
      %v1572 = vsel %vm1111, %v1546, 0
      %v1575 = vsel %vm1111, %v1547, 0
      %1577 = vmatprep.subr.bf16.mxu0 0
      %1578 = vmatpush1.bf16.msra.mxu0 0
      %1579 = vmatprep.subr.bf16.mxu0 0
      %1580 = vmatpush1.bf16.msra.mxu0 0
      %1581 = vmatprep.subr.bf16.mxu0 0
      %1582 = vmatpush1.bf16.msra.mxu0 0
      %1583 = vmatprep.subr.bf16.mxu0 0
      %1584 = vmatpush1.bf16.msra.mxu0 0
      %1585 = vmatprep.subr.bf16.mxu0 0
      %1586 = vmatpush1.bf16.msra.mxu0 0
      %1587 = vmatprep.subr.bf16.mxu0 0
      %1588 = vmatpush1.bf16.msra.mxu0 0
      %1589 = vmatprep.subr.bf16.mxu0 0
      %1590 = vmatpush1.bf16.msra.mxu0 %v1568
      %1591 = vmatprep.subr.bf16.mxu0 0
      %1592 = vmatpush1.bf16.msra.mxu0 %v1567
      %1593 = vmatprep.subr.bf16.mxu0 0
      %1594 = vmatpush2.bf16.msra.mxu0 0
      %1595 = vmatprep.subr.bf16.mxu0 0
      %1596 = vmatpush2.bf16.msra.mxu0 0
      %1597 = vmatprep.subr.bf16.mxu0 0
      %1598 = vmatpush2.bf16.msra.mxu0 0
      %1599 = vmatprep.subr.bf16.mxu0 0
      %1600 = vmatpush2.bf16.msra.mxu0 0
      %1601 = vmatprep.subr.bf16.mxu0 0
      %1602 = vmatpush2.bf16.msra.mxu0 0
      %1603 = vmatprep.subr.bf16.mxu0 0
      %1604 = vmatpush2.bf16.msra.mxu0 0
      %1605 = vmatprep.subr.bf16.mxu0 0
      %1606 = vmatpush2.bf16.msra.mxu0 0
      %1607 = vmatprep.subr.bf16.mxu0 0
      %1608 = vmatpush2.bf16.msra.mxu0 0
      %1609 = vmatprep.mubr.bf16.mxu0 0
      %1610 = vmatmul.mubr.bf16.gmra.mxu0 %v1572
      %v1611 = vpop.f32.mrf.mxu0
      %v1612 = vadd.f32 %v1557, %v1611
      %v1613 = vpop.f32.mrf.mxu0
      %v1614 = vpop.f32.mrf.mxu0
      %v1615 = vadd.f32 %v1557, %v1614
      %v1616 = vpop.f32.mrf.mxu0
      %1617 = vmatprep.mubr.bf16.mxu0 0
      %1618 = vmatmul.mubr.bf16.gmra.mxu0 %v1575
      %v1619 = vpop.f32.mrf.mxu0
      %v1620 = vadd.f32 %v1557, %v1619
      %v1621 = vpop.f32.mrf.mxu0
      %v1622 = vpop.f32.mrf.mxu0
      %v1623 = vadd.f32 %v1557, %v1622
      %v1624 = vpop.f32.mrf.mxu0
      %1625 = vdwg.mxu0
      %v1626 = vadd.f32 %v1612, %v1082
      %v1627 = vadd.f32 %v1615, %v1083
      %v1628 = vadd.f32 %v1620, %v1084
      %v1629 = vadd.f32 %v1623, %v1085
      %v1630 = vld [vmem:[%s904] sm:$0x1]
      %v1631 = vld [vmem:[%s907] sm:$0x1]
      %v1632 = vsel %vm1111, %v1626, 0.0
      %1633 = vadd.xlane.f32.xlu0 %v1632
      %v1634 = vpop.xlane.xlu0 %1633
      %v1635 = vsel %vm1111, %v1627, 0.0
      %1636 = vadd.xlane.f32.xlu0 %v1635
      %v1637 = vpop.xlane.xlu0 %1636
      %v1638 = vsel %vm1111, %v1628, 0.0
      %1639 = vadd.xlane.f32.xlu0 %v1638
      %v1640 = vpop.xlane.xlu0 %1639
      %v1641 = vsel %vm1111, %v1629, 0.0
      %1642 = vadd.xlane.f32.xlu0 %v1641
      %v1643 = vpop.xlane.xlu0 %1642
      %v1644 = vrcp.pop 32.0
      %v1645 = vmul.f32 %v1634, %v1644
      %v1646 = vmul.f32 %v1637, %v1644
      %v1647 = vmul.f32 %v1640, %v1644
      %v1648 = vmul.f32 %v1643, %v1644
      %v1649 = vmul.f32 %v1626, %v1626
      %v1650 = vmul.f32 %v1627, %v1627
      %v1651 = vmul.f32 %v1628, %v1628
      %v1652 = vmul.f32 %v1629, %v1629
      %v1653 = vsel %vm1111, %v1649, 0.0
      %1654 = vadd.xlane.f32.xlu0 %v1653
      %v1655 = vpop.xlane.xlu0 %1654
      %v1656 = vsel %vm1111, %v1650, 0.0
      %1657 = vadd.xlane.f32.xlu0 %v1656
      %v1658 = vpop.xlane.xlu0 %1657
      %v1659 = vsel %vm1111, %v1651, 0.0
      %1660 = vadd.xlane.f32.xlu0 %v1659
      %v1661 = vpop.xlane.xlu0 %1660
      %v1662 = vsel %vm1111, %v1652, 0.0
      %1663 = vadd.xlane.f32.xlu0 %v1662
      %v1664 = vpop.xlane.xlu0 %1663
      %v1665 = vmul.f32 %v1655, %v1644
      %v1666 = vmul.f32 %v1658, %v1644
      %v1667 = vmul.f32 %v1661, %v1644
      %v1668 = vmul.f32 %v1664, %v1644
      %v1669 = vmul.f32 %v1645, %v1645
      %v1670 = vmul.f32 %v1646, %v1646
      %v1671 = vmul.f32 %v1647, %v1647
      %v1672 = vmul.f32 %v1648, %v1648
      %v1673 = vsub.f32 %v1665, %v1669
      %v1674 = vsub.f32 %v1666, %v1670
      %v1675 = vsub.f32 %v1667, %v1671
      %v1676 = vsub.f32 %v1668, %v1672
      %v1677 = vsub.f32 %v1626, %v1645
      %v1678 = vsub.f32 %v1627, %v1646
      %v1679 = vsub.f32 %v1628, %v1647
      %v1680 = vsub.f32 %v1629, %v1648
      %v1681 = vadd.f32 %v1673, 1e-05
      %v1682 = vadd.f32 %v1674, 1e-05
      %v1683 = vadd.f32 %v1675, 1e-05
      %v1684 = vadd.f32 %v1676, 1e-05
      %v1685 = vrsqrt.pop %v1681
      %v1686 = vrsqrt.pop %v1682
      %v1687 = vrsqrt.pop %v1683
      %v1688 = vrsqrt.pop %v1684
      %v1689 = vmul.f32 %v1677, %v1685
      %v1690 = vmul.f32 %v1678, %v1686
      %v1691 = vmul.f32 %v1679, %v1687
      %v1692 = vmul.f32 %v1680, %v1688
      %v1694 = vlaneseq
      %v1695 = vshrl.u32 %v1694, 7
      %v1696 = vsub.s32 0, %v1695
      %v1697 = vrot.slane %v1630, %v1696
      %v1699 = vmul.f32 %v1689, %v1697
      %v1700 = vmul.f32 %v1690, %v1697
      %v1701 = vmul.f32 %v1691, %v1697
      %v1702 = vmul.f32 %v1692, %v1697
      %v1704 = vlaneseq
      %v1705 = vshrl.u32 %v1704, 7
      %v1706 = vsub.s32 0, %v1705
      %v1707 = vrot.slane %v1631, %v1706
      %v1709 = vadd.f32 %v1699, %v1707
      %v1710 = vadd.f32 %v1700, %v1707
      %v1711 = vadd.f32 %v1701, %v1707
      %v1712 = vadd.f32 %v1702, %v1707
      %v1713 = vpack.c.bf16 %v1710, %v1709
      %v1714 = vpack.c.bf16 %v1712, %v1711
      %v1715 = vld [vmem:[%s912] sm:$0xf]
      %v1716 = vld [vmem:[%s912 + $0x4] sm:$0xf]
      %v1717 = vld [vmem:[%s912 + $0x8] sm:$0xf]
      %v1718 = vld [vmem:[%s912 + $0xc] sm:$0xf]
      %v1719 = vld [vmem:[%s915] sm:$0x1]
      %v1721 = vlaneseq
      %v1722 = vshrl.u32 %v1721, 7
      %v1723 = vsub.s32 0, %v1722
      %v1724 = vrot.slane %v1719, %v1723
      %v1730 = vunpack.c.l.b16 %v1715
      %v1731 = vunpack.c.l.b16 %v1716
      %v1732 = vunpack.c.l.b16 %v1717
      %v1733 = vunpack.c.l.b16 %v1718
      %v1734 = vpack.c.b16 %v1731, %v1730
      %v1735 = vpack.c.b16 %v1733, %v1732
      %v1739 = vsel %vm1111, %v1713, 0
      %v1742 = vsel %vm1111, %v1714, 0
      %1744 = vmatprep.subr.bf16.mxu0 0
      %1745 = vmatpush1.bf16.msra.mxu0 0
      %1746 = vmatprep.subr.bf16.mxu0 0
      %1747 = vmatpush1.bf16.msra.mxu0 0
      %1748 = vmatprep.subr.bf16.mxu0 0
      %1749 = vmatpush1.bf16.msra.mxu0 0
      %1750 = vmatprep.subr.bf16.mxu0 0
      %1751 = vmatpush1.bf16.msra.mxu0 0
      %1752 = vmatprep.subr.bf16.mxu0 0
      %1753 = vmatpush1.bf16.msra.mxu0 0
      %1754 = vmatprep.subr.bf16.mxu0 0
      %1755 = vmatpush1.bf16.msra.mxu0 0
      %1756 = vmatprep.subr.bf16.mxu0 0
      %1757 = vmatpush1.bf16.msra.mxu0 %v1735
      %1758 = vmatprep.subr.bf16.mxu0 0
      %1759 = vmatpush1.bf16.msra.mxu0 %v1734
      %1760 = vmatprep.subr.bf16.mxu0 0
      %1761 = vmatpush2.bf16.msra.mxu0 0
      %1762 = vmatprep.subr.bf16.mxu0 0
      %1763 = vmatpush2.bf16.msra.mxu0 0
      %1764 = vmatprep.subr.bf16.mxu0 0
      %1765 = vmatpush2.bf16.msra.mxu0 0
      %1766 = vmatprep.subr.bf16.mxu0 0
      %1767 = vmatpush2.bf16.msra.mxu0 0
      %1768 = vmatprep.subr.bf16.mxu0 0
      %1769 = vmatpush2.bf16.msra.mxu0 0
      %1770 = vmatprep.subr.bf16.mxu0 0
      %1771 = vmatpush2.bf16.msra.mxu0 0
      %1772 = vmatprep.subr.bf16.mxu0 0
      %1773 = vmatpush2.bf16.msra.mxu0 0
      %1774 = vmatprep.subr.bf16.mxu0 0
      %1775 = vmatpush2.bf16.msra.mxu0 0
      %1776 = vmatprep.mubr.bf16.mxu0 0
      %1777 = vmatmul.mubr.bf16.gmra.mxu0 %v1739
      %v1778 = vpop.f32.mrf.mxu0
      %v1779 = vadd.f32 %v1724, %v1778
      %v1780 = vpop.f32.mrf.mxu0
      %v1781 = vpop.f32.mrf.mxu0
      %v1782 = vadd.f32 %v1724, %v1781
      %v1783 = vpop.f32.mrf.mxu0
      %1784 = vmatprep.mubr.bf16.mxu0 0
      %1785 = vmatmul.mubr.bf16.gmra.mxu0 %v1742
      %v1786 = vpop.f32.mrf.mxu0
      %v1787 = vadd.f32 %v1724, %v1786
      %v1788 = vpop.f32.mrf.mxu0
      %v1789 = vpop.f32.mrf.mxu0
      %v1790 = vadd.f32 %v1724, %v1789
      %v1791 = vpop.f32.mrf.mxu0
      %1792 = vdwg.mxu0
      %v1793 = vmax.f32 %v1779, 0.0
      %v1794 = vmax.f32 %v1782, 0.0
      %v1795 = vmax.f32 %v1787, 0.0
      %v1796 = vmax.f32 %v1790, 0.0
      %v1797 = vpack.c.bf16 %v1794, %v1793
      %v1798 = vpack.c.bf16 %v1796, %v1795
      %v1799 = vld [vmem:[%s920] sm:$0xf]
      %v1800 = vld [vmem:[%s920 + $0x4] sm:$0xf]
      %v1801 = vld [vmem:[%s920 + $0x8] sm:$0xf]
      %v1802 = vld [vmem:[%s920 + $0xc] sm:$0xf]
      %v1803 = vld [vmem:[%s920 + $0x10] sm:$0xf]
      %v1804 = vld [vmem:[%s920 + $0x14] sm:$0xf]
      %v1805 = vld [vmem:[%s920 + $0x18] sm:$0xf]
      %v1806 = vld [vmem:[%s920 + $0x1c] sm:$0xf]
      %v1807 = vld [vmem:[%s920 + $0x20] sm:$0xf]
      %v1808 = vld [vmem:[%s920 + $0x24] sm:$0xf]
      %v1809 = vld [vmem:[%s920 + $0x28] sm:$0xf]
      %v1810 = vld [vmem:[%s920 + $0x2c] sm:$0xf]
      %v1811 = vld [vmem:[%s920 + $0x30] sm:$0xf]
      %v1812 = vld [vmem:[%s920 + $0x34] sm:$0xf]
      %v1813 = vld [vmem:[%s920 + $0x38] sm:$0xf]
      %v1814 = vld [vmem:[%s920 + $0x3c] sm:$0xf]
      %v1815 = vld [vmem:[%s923] sm:$0x1]
      %v1817 = vlaneseq
      %v1818 = vshrl.u32 %v1817, 7
      %v1819 = vsub.s32 0, %v1818
      %v1820 = vrot.slane %v1815, %v1819
      %v1838 = vunpack.c.l.b16 %v1799
      %v1839 = vunpack.c.l.b16 %v1800
      %v1840 = vunpack.c.l.b16 %v1801
      %v1841 = vunpack.c.l.b16 %v1802
      %v1842 = vunpack.c.l.b16 %v1803
      %v1843 = vunpack.c.l.b16 %v1804
      %v1844 = vunpack.c.l.b16 %v1805
      %v1845 = vunpack.c.l.b16 %v1806
      %v1846 = vunpack.c.l.b16 %v1807
      %v1847 = vunpack.c.l.b16 %v1808
      %v1848 = vunpack.c.l.b16 %v1809
      %v1849 = vunpack.c.l.b16 %v1810
      %v1850 = vunpack.c.l.b16 %v1811
      %v1851 = vunpack.c.l.b16 %v1812
      %v1852 = vunpack.c.l.b16 %v1813
      %v1853 = vunpack.c.l.b16 %v1814
      %v1854 = vpack.c.b16 %v1839, %v1838
      %v1855 = vpack.c.b16 %v1841, %v1840
      %v1856 = vpack.c.b16 %v1843, %v1842
      %v1857 = vpack.c.b16 %v1845, %v1844
      %v1858 = vpack.c.b16 %v1847, %v1846
      %v1859 = vpack.c.b16 %v1849, %v1848
      %v1860 = vpack.c.b16 %v1851, %v1850
      %v1861 = vpack.c.b16 %v1853, %v1852
      %1870 = vmatprep.subr.bf16.mxu0 0
      %1871 = vmatpush1.bf16.msra.mxu0 %v1861
      %1872 = vmatprep.subr.bf16.mxu0 0
      %1873 = vmatpush1.bf16.msra.mxu0 %v1860
      %1874 = vmatprep.subr.bf16.mxu0 0
      %1875 = vmatpush1.bf16.msra.mxu0 %v1859
      %1876 = vmatprep.subr.bf16.mxu0 0
      %1877 = vmatpush1.bf16.msra.mxu0 %v1858
      %1878 = vmatprep.subr.bf16.mxu0 0
      %1879 = vmatpush1.bf16.msra.mxu0 %v1857
      %1880 = vmatprep.subr.bf16.mxu0 0
      %1881 = vmatpush1.bf16.msra.mxu0 %v1856
      %1882 = vmatprep.subr.bf16.mxu0 0
      %1883 = vmatpush1.bf16.msra.mxu0 %v1855
      %1884 = vmatprep.subr.bf16.mxu0 0
      %1885 = vmatpush1.bf16.msra.mxu0 %v1854
      %1886 = vmatprep.subr.bf16.mxu0 0
      %1887 = vmatpush2.bf16.msra.mxu0 0
      %1888 = vmatprep.subr.bf16.mxu0 0
      %1889 = vmatpush2.bf16.msra.mxu0 0
      %1890 = vmatprep.subr.bf16.mxu0 0
      %1891 = vmatpush2.bf16.msra.mxu0 0
      %1892 = vmatprep.subr.bf16.mxu0 0
      %1893 = vmatpush2.bf16.msra.mxu0 0
      %1894 = vmatprep.subr.bf16.mxu0 0
      %1895 = vmatpush2.bf16.msra.mxu0 0
      %1896 = vmatprep.subr.bf16.mxu0 0
      %1897 = vmatpush2.bf16.msra.mxu0 0
      %1898 = vmatprep.subr.bf16.mxu0 0
      %1899 = vmatpush2.bf16.msra.mxu0 0
      %1900 = vmatprep.subr.bf16.mxu0 0
      %1901 = vmatpush2.bf16.msra.mxu0 0
      %1902 = vmatprep.mubr.bf16.mxu0 0
      %1903 = vmatmul.mubr.bf16.gmra.mxu0 %v1797
      %v1904 = vpop.f32.mrf.mxu0
      %v1905 = vadd.f32 %v1820, %v1904
      %v1906 = vpop.f32.mrf.mxu0
      %v1907 = vpop.f32.mrf.mxu0
      %v1908 = vadd.f32 %v1820, %v1907
      %v1909 = vpop.f32.mrf.mxu0
      %1910 = vmatprep.mubr.bf16.mxu0 0
      %1911 = vmatmul.mubr.bf16.gmra.mxu0 %v1798
      %v1912 = vpop.f32.mrf.mxu0
      %v1913 = vadd.f32 %v1820, %v1912
      %v1914 = vpop.f32.mrf.mxu0
      %v1915 = vpop.f32.mrf.mxu0
      %v1916 = vadd.f32 %v1820, %v1915
      %v1917 = vpop.f32.mrf.mxu0
      %1918 = vdwg.mxu0
      %v1919 = vadd.f32 %v1905, %v1709
      %v1920 = vadd.f32 %v1908, %v1710
      %v1921 = vadd.f32 %v1913, %v1711
      %v1922 = vadd.f32 %v1916, %v1712
      %v1923 = vld [vmem:[%s926] sm:$0x1]
      %v1924 = vld [vmem:[%s929] sm:$0x1]
      %v1925 = vsel %vm1111, %v1919, 0.0
      %1926 = vadd.xlane.f32.xlu0 %v1925
      %v1927 = vpop.xlane.xlu0 %1926
      %v1928 = vsel %vm1111, %v1920, 0.0
      %1929 = vadd.xlane.f32.xlu0 %v1928
      %v1930 = vpop.xlane.xlu0 %1929
      %v1931 = vsel %vm1111, %v1921, 0.0
      %1932 = vadd.xlane.f32.xlu0 %v1931
      %v1933 = vpop.xlane.xlu0 %1932
      %v1934 = vsel %vm1111, %v1922, 0.0
      %1935 = vadd.xlane.f32.xlu0 %v1934
      %v1936 = vpop.xlane.xlu0 %1935
      %v1937 = vmul.f32 %v1927, %v1644
      %v1938 = vmul.f32 %v1930, %v1644
      %v1939 = vmul.f32 %v1933, %v1644
      %v1940 = vmul.f32 %v1936, %v1644
      %v1941 = vmul.f32 %v1919, %v1919
      %v1942 = vmul.f32 %v1920, %v1920
      %v1943 = vmul.f32 %v1921, %v1921
      %v1944 = vmul.f32 %v1922, %v1922
      %v1945 = vsel %vm1111, %v1941, 0.0
      %1946 = vadd.xlane.f32.xlu0 %v1945
      %v1947 = vpop.xlane.xlu0 %1946
      %v1948 = vsel %vm1111, %v1942, 0.0
      %1949 = vadd.xlane.f32.xlu0 %v1948
      %v1950 = vpop.xlane.xlu0 %1949
      %v1951 = vsel %vm1111, %v1943, 0.0
      %1952 = vadd.xlane.f32.xlu0 %v1951
      %v1953 = vpop.xlane.xlu0 %1952
      %v1954 = vsel %vm1111, %v1944, 0.0
      %1955 = vadd.xlane.f32.xlu0 %v1954
      %v1956 = vpop.xlane.xlu0 %1955
      %v1957 = vmul.f32 %v1947, %v1644
      %v1958 = vmul.f32 %v1950, %v1644
      %v1959 = vmul.f32 %v1953, %v1644
      %v1960 = vmul.f32 %v1956, %v1644
      %v1961 = vmul.f32 %v1937, %v1937
      %v1962 = vmul.f32 %v1938, %v1938
      %v1963 = vmul.f32 %v1939, %v1939
      %v1964 = vmul.f32 %v1940, %v1940
      %v1965 = vsub.f32 %v1957, %v1961
      %v1966 = vsub.f32 %v1958, %v1962
      %v1967 = vsub.f32 %v1959, %v1963
      %v1968 = vsub.f32 %v1960, %v1964
      %v1969 = vsub.f32 %v1919, %v1937
      %v1970 = vsub.f32 %v1920, %v1938
      %v1971 = vsub.f32 %v1921, %v1939
      %v1972 = vsub.f32 %v1922, %v1940
      %v1973 = vadd.f32 %v1965, 1e-05
      %v1974 = vadd.f32 %v1966, 1e-05
      %v1975 = vadd.f32 %v1967, 1e-05
      %v1976 = vadd.f32 %v1968, 1e-05
      %v1977 = vrsqrt.pop %v1973
      %v1978 = vrsqrt.pop %v1974
      %v1979 = vrsqrt.pop %v1975
      %v1980 = vrsqrt.pop %v1976
      %v1981 = vmul.f32 %v1969, %v1977
      %v1982 = vmul.f32 %v1970, %v1978
      %v1983 = vmul.f32 %v1971, %v1979
      %v1984 = vmul.f32 %v1972, %v1980
      %v1986 = vlaneseq
      %v1987 = vshrl.u32 %v1986, 7
      %v1988 = vsub.s32 0, %v1987
      %v1989 = vrot.slane %v1923, %v1988
      %v1991 = vmul.f32 %v1981, %v1989
      %v1992 = vmul.f32 %v1982, %v1989
      %v1993 = vmul.f32 %v1983, %v1989
      %v1994 = vmul.f32 %v1984, %v1989
      %v1996 = vlaneseq
      %v1997 = vshrl.u32 %v1996, 7
      %v1998 = vsub.s32 0, %v1997
      %v1999 = vrot.slane %v1924, %v1998
      %v2001 = vadd.f32 %v1991, %v1999
      %v2002 = vadd.f32 %v1992, %v1999
      %v2003 = vadd.f32 %v1993, %v1999
      %v2004 = vadd.f32 %v1994, %v1999
      %2005 = vst.msk [vmem:[#allocation2] sm:$0xff] %vm1111, %v2001
      %2006 = vst.msk [vmem:[#allocation2 + $0x8] sm:$0xff] %vm1111, %v2002
      %2007 = vst.msk [vmem:[#allocation2 + $0x10] sm:$0xff] %vm1111, %v2003
      %2008 = vst.msk [vmem:[#allocation2 + $0x18] sm:$0xff] %vm1111, %v2004
      %p2009 = scmp.eq.s32.totalorder %s37, 1
      // Predicated region
      $region109: #{vision_transformer_forward.1} parent=103 // pred_check
        %p2010 = pneg %p2009
      $region110: #{vision_transformer_forward.1} parent=103 // pred_check_branch
        %2012 = sbr.rel (%p2010) target = $region112
      $region111: #{vision_transformer_forward.1} parent=103 // pred_region
        %v2013 = vpack.c.bf16 %v2002, %v2001
        %v2014 = vpack.c.bf16 %v2004, %v2003
        %v2015 = vld [vmem:[%s3] sm:$0xf]
        %v2016 = vld [vmem:[%s3 + $0x4] sm:$0xf]
        %v2017 = vld [vmem:[%s3 + $0x8] sm:$0xf]
        %v2018 = vld [vmem:[%s3 + $0xc] sm:$0xf]
        %v2019 = vld [vmem:[%s4] sm:$0x1]
        %v2021 = vlaneseq
        %v2022 = vshrl.u32 %v2021, 7
        %v2023 = vsub.s32 0, %v2022
        %v2024 = vrot.slane %v2019, %v2023
        %v2030 = vunpack.c.l.b16 %v2015
        %v2031 = vunpack.c.l.b16 %v2016
        %v2032 = vunpack.c.l.b16 %v2017
        %v2033 = vunpack.c.l.b16 %v2018
        %v2034 = vpack.c.b16 %v2031, %v2030
        %v2035 = vpack.c.b16 %v2033, %v2032
        %v2039 = vsel %vm1111, %v2013, 0
        %v2042 = vsel %vm1111, %v2014, 0
        %2044 = vmatprep.subr.bf16.mxu0 0
        %2045 = vmatpush1.bf16.msra.mxu0 0
        %2046 = vmatprep.subr.bf16.mxu0 0
        %2047 = vmatpush1.bf16.msra.mxu0 0
        %2048 = vmatprep.subr.bf16.mxu0 0
        %2049 = vmatpush1.bf16.msra.mxu0 0
        %2050 = vmatprep.subr.bf16.mxu0 0
        %2051 = vmatpush1.bf16.msra.mxu0 0
        %2052 = vmatprep.subr.bf16.mxu0 0
        %2053 = vmatpush1.bf16.msra.mxu0 0
        %2054 = vmatprep.subr.bf16.mxu0 0
        %2055 = vmatpush1.bf16.msra.mxu0 0
        %2056 = vmatprep.subr.bf16.mxu0 0
        %2057 = vmatpush1.bf16.msra.mxu0 %v2035
        %2058 = vmatprep.subr.bf16.mxu0 0
        %2059 = vmatpush1.bf16.msra.mxu0 %v2034
        %2060 = vmatprep.subr.bf16.mxu0 0
        %2061 = vmatpush2.bf16.msra.mxu0 0
        %2062 = vmatprep.subr.bf16.mxu0 0
        %2063 = vmatpush2.bf16.msra.mxu0 0
        %2064 = vmatprep.subr.bf16.mxu0 0
        %2065 = vmatpush2.bf16.msra.mxu0 0
        %2066 = vmatprep.subr.bf16.mxu0 0
        %2067 = vmatpush2.bf16.msra.mxu0 0
        %2068 = vmatprep.subr.bf16.mxu0 0
        %2069 = vmatpush2.bf16.msra.mxu0 0
        %2070 = vmatprep.subr.bf16.mxu0 0
        %2071 = vmatpush2.bf16.msra.mxu0 0
        %2072 = vmatprep.subr.bf16.mxu0 0
        %2073 = vmatpush2.bf16.msra.mxu0 0
        %2074 = vmatprep.subr.bf16.mxu0 0
        %2075 = vmatpush2.bf16.msra.mxu0 0
        %2076 = vmatprep.mubr.bf16.mxu0 0
        %2077 = vmatmul.mubr.bf16.gmra.mxu0 %v2039
        %v2078 = vpop.f32.mrf.mxu0
        %v2079 = vadd.f32 %v2024, %v2078
        %v2080 = vpop.f32.mrf.mxu0
        %v2081 = vpop.f32.mrf.mxu0
        %v2082 = vadd.f32 %v2024, %v2081
        %v2083 = vpop.f32.mrf.mxu0
        %2084 = vmatprep.mubr.bf16.mxu0 0
        %2085 = vmatmul.mubr.bf16.gmra.mxu0 %v2042
        %v2086 = vpop.f32.mrf.mxu0
        %v2087 = vadd.f32 %v2024, %v2086
        %v2088 = vpop.f32.mrf.mxu0
        %v2089 = vpop.f32.mrf.mxu0
        %v2090 = vadd.f32 %v2024, %v2089
        %v2091 = vpop.f32.mrf.mxu0
        %2092 = vdwg.mxu0
        %2093 = vst [vmem:[%s935] sm:$0xff] %v2079
        %2094 = vst [vmem:[%s935 + $0x8] sm:$0xff] %v2082
        %2095 = vst [vmem:[%s935 + $0x10] sm:$0xff] %v2087
        %2096 = vst [vmem:[%s935 + $0x18] sm:$0xff] %v2090
      $region112: #{vision_transformer_forward.1} parent=103 // pred_fallthru
        _
      %s2097 = smul.u32 2, %s36
      %p2098 = scmp.lt.s32.totalorder %s2097, 3
      %s2099 = scalar_select %p2098, %s2097, 3
      %s2100 = smul.addr %s2099, 2
      %s2101 = smul.addr %s2100, 8
      %s2102 = scalar_lea.vmem %s21, %s2101
      // Predicated region
      $region113: #{vision_transformer_forward.1} parent=103 // pred_check
        %p2103 = pneg %p588
      $region114: #{vision_transformer_forward.1} parent=103 // pred_check_branch
        %2105 = sbr.rel (%p2103) target = $region116
      $region115: #{vision_transformer_forward.1} parent=103 // pred_region
        %s2106 = smul.u32 2, %s36
      $region116: #{vision_transformer_forward.1} parent=103 // pred_fallthru
        _
    $region104: #{vision_transformer_forward.1} parent=5 // pred_fallthru
      _
    %p2107 = scmp.le.s32.totalorder 2, %s27
    // Predicated region
    $region117: #{vision_transformer_forward.1} parent=5 // pred_check
      %p2108 = pneg %p2107
    $region118: #{vision_transformer_forward.1} parent=5 // pred_check_branch
      %2110 = sbr.rel (%p2108) target = $region120
    $region119: #{vision_transformer_forward.1} parent=5 // pred_region
      %s2111 = ssub.s32 %s27, 2
      // Predicated region
      $region121: #{vision_transformer_forward.1} parent=119 // pred_check
        %p2112 = pneg %p594
      $region122: #{vision_transformer_forward.1} parent=119 // pred_check_branch
        %2114 = sbr.rel (%p2112) target = $region124
      $region123: #{vision_transformer_forward.1} parent=119 // pred_region
        %s2115 = smul.u32 2, %s38
        %p2116 = scmp.lt.s32.totalorder %s2115, 3
        %s2117 = scalar_select %p2116, %s2115, 3
        %s2118 = smul.addr %s2117, 2
        %s2119 = smul.addr %s2118, 8
        %s2120 = scalar_lea.vmem %s21, %s2119
      $region124: #{vision_transformer_forward.1} parent=119 // pred_fallthru
        _
    $region120: #{vision_transformer_forward.1} parent=5 // pred_fallthru
      _
  $region6: #{vision_transformer_forward.1} parent=0 // loop_footer
    %s31 = sadd.s32 1, %s27
  $region7: #{vision_transformer_forward.1} parent=0 // loop_footer_branch
    %26 = sbr.rel target = $region3
  $region8: #{vision_transformer_forward.1} parent=0 // loop_exit
    _

</llo_original>
